<compile_context>
chip_gen: v7x
topology: tpu7x:2x2x1
jax: 0.10.0
libtpu: 0.0.40
codegen_flags: <defaults>
</compile_context>

<pallas_src>
import functools

import jax
import jax.numpy as jnp
import numpy as np
from jax.experimental import pallas as pl
from jax.experimental.pallas import tpu as pltpu

# ----------------------------- configuration --------------------------------
N = 2                  # batch
T = 10                 # input trajectory length (>= n_shifts)
D = 4                  # state dim = enc_shape[0]
H1, H2 = 32, 32        # encoder hidden widths
L = 8                  # encoder output dim = enc_shape[-1]
LDIM = D + L           # lifted dim = dim + enc_shape[-1]
N_SHIFTS = 8           # params['n_shifts'] (<= T)

ENC_SHAPE = [D, H1, H2, L]   # Linear(D,H1,b) relu, Linear(H1,H2,b) relu, Linear(H2,L,no bias)

# MXU operand dtype.  jnp.float32 keeps the tight 2e-4 check; on v6e/v7x at
# scale switch to jnp.bfloat16 (accumulation stays f32 via
# preferred_element_type) and re-validate with a looser tolerance.
MATMUL_DTYPE = jnp.float32


# ------------------------------ fused kernel ---------------------------------
def deina_fused_kernel(x_ref, u_ref, w1_ref, b1_ref, w2_ref, b2_ref, w3_ref,
                       bw_ref, kw_ref, y_ref, ypred_ref, *, tm, s, d, l):
    """Whole DEINA forward for one batch tile of TM trajectories.

    x_ref:  (tm*s, d)   row layout (row = b*s + t)   -> encoder / y
    u_ref:  (tm, s*d)   lane-dense layout            -> per-step Bu
    y_ref:  (tm*s, ld)  y = cat([x, g], -1)
    ypred_ref: (tm, s*ld) lane-dense rollout output (step t in lanes t*ld:(t+1)*ld)
    """
    ld = d + l
    f32 = jnp.float32
    mmt = MATMUL_DTYPE

    # --- encoder g(x): one batched pass over all tm*s rows (3 MXU matmuls) ---
    x2 = x_ref[...]                                                   # (tm*s, d)
    h = jnp.dot(x2.astype(mmt), w1_ref[...],
                preferred_element_type=f32) + b1_ref[...]
    h = jnp.maximum(h, 0.0)
    h = jnp.dot(h.astype(mmt), w2_ref[...],
                preferred_element_type=f32) + b2_ref[...]
    h = jnp.maximum(h, 0.0)
    g2 = jnp.dot(h.astype(mmt), w3_ref[...],
                 preferred_element_type=f32)                          # (tm*s, l)

    # --- y = cat([x, g], -1): in-register lane concat, ONE block store ------
    y_ref[...] = jnp.concatenate([x2, g2], axis=-1)                   # (tm*s, ld)

    # --- rollout --------------------------------------------------------------
    kw = kw_ref[...]                                                  # (ld, ld) = K^T
    bw = bw_ref[...]                                                  # (d, ld)  = B^T
    u_ld = u_ref[...]                                                 # (tm, s*d)

    # y_pred[:, 0, :] = y[:, 0, :]  -> rows {0, s, 2s, ...} of the y block,
    # read back with a documented strided ref read (no reshape, no gather).
    yc = y_ref[pl.ds(0, tm, stride=s), :]                             # (tm, ld)
    preds = [yc]
    # Static unroll (s is small).  Each Bu term is independent of the serial
    # Koopman chain, so its MXU push co-issues with the chain.
    for t in range(1, s):
        u_t = u_ld[:, (t - 1) * d:t * d]                              # (tm, d)
        bu_t = jnp.dot(u_t.astype(mmt), bw, preferred_element_type=f32)
        yc = jnp.dot(yc.astype(mmt), kw, preferred_element_type=f32) + bu_t
        preds.append(yc)

    # Single lane-dense store for the whole rollout (was ~18 masked partial
    # stores before).
    ypred_ref[...] = jnp.concatenate(preds, axis=-1)                  # (tm, s*ld)


# ------------------------------- wrapper --------------------------------------
def deina_forward(x, u, weights, *, n_shifts=N_SHIFTS, block_batch=256):
    """x, u: (N, T, D) float32.  Returns (y, y_pred), both (N, n_shifts, D+L)."""
    (w1, b1, w2, b2, w3, bw, kw) = weights
    n, _, d = x.shape
    l = w3.shape[1]
    ld = d + l
    s = n_shifts

    # n_shifts slice + layout flattening done wrapper-side (pure layout
    # plumbing) so the kernel never needs a tile-boundary-crossing reshape.
    xs = x[:, :s, :]
    us = u[:, :s, :]

    tm = min(n, block_batch)          # block_batch should be a multiple of 8
    n_pad = pl.cdiv(n, tm) * tm
    if n_pad != n:
        pad = ((0, n_pad - n), (0, 0), (0, 0))
        xs = jnp.pad(xs, pad)
        us = jnp.pad(us, pad)

    x_rows = xs.reshape(n_pad * s, d)         # row layout for the batched encoder
    u_ld = us.reshape(n_pad, s * d)           # lane-dense layout for per-step Bu

    mmt = MATMUL_DTYPE
    w1m, w2m, w3m, bwm, kwm = (w.astype(mmt) for w in (w1, w2, w3, bw, kw))

    kernel = functools.partial(deina_fused_kernel, tm=tm, s=s, d=d, l=l)
    grid = (n_pad // tm,)

    y_flat, yp_flat = pl.pallas_call(
        kernel,
        out_shape=(jax.ShapeDtypeStruct((n_pad * s, ld), jnp.float32),
                   jax.ShapeDtypeStruct((n_pad, s * ld), jnp.float32)),
        grid=grid,
        in_specs=[
            pl.BlockSpec((tm * s, d), lambda i: (i, 0)),   # x rows of this batch tile
            pl.BlockSpec((tm, s * d), lambda i: (i, 0)),   # u (lane-dense) of this tile
            pl.BlockSpec(w1m.shape, lambda i: (0, 0)),     # weights: full, resident
            pl.BlockSpec(b1.shape, lambda i: (0, 0)),
            pl.BlockSpec(w2m.shape, lambda i: (0, 0)),
            pl.BlockSpec(b2.shape, lambda i: (0, 0)),
            pl.BlockSpec(w3m.shape, lambda i: (0, 0)),
            pl.BlockSpec(bwm.shape, lambda i: (0, 0)),
            pl.BlockSpec(kwm.shape, lambda i: (0, 0)),
        ],
        out_specs=(pl.BlockSpec((tm * s, ld), lambda i: (i, 0)),
                   pl.BlockSpec((tm, s * ld), lambda i: (i, 0))),
        compiler_params=pltpu.CompilerParams(
            dimension_semantics=("parallel",)),
    )(x_rows, u_ld, w1m, b1, w2m, b2, w3m, bwm, kwm)

    y = y_flat.reshape(n_pad, s, ld)[:n]
    y_pred = yp_flat.reshape(n_pad, s, ld)[:n]
    return y, y_pred


# --------------------------- pure-JAX reference -------------------------------
def reference_forward(x, u, weights):
    (w1, b1, w2, b2, w3, bw, kw) = weights
    xs = x[:, :N_SHIFTS, :]
    us = u[:, :N_SHIFTS, :]
    h = jax.nn.relu(xs @ w1 + b1)
    h = jax.nn.relu(h @ w2 + b2)
    g = h @ w3
    y = jnp.concatenate([xs, g], axis=-1)
    bu = us @ bw
    yp = y[:, 0, :]
    preds = [yp]
    for i in range(N_SHIFTS - 1):
        yp = yp @ kw + bu[:, i, :]
        preds.append(yp)
    y_pred = jnp.stack(preds, axis=1)
    return y, y_pred


# ------------------------------- main -----------------------------------------
if __name__ == "__main__":
    key = jax.random.PRNGKey(0)
    ks = jax.random.split(key, 10)
    f32 = jnp.float32

    # Encoder weights (PyTorch (out,in) stored pre-transposed as (in,out)).
    w1 = (0.3 * jax.random.normal(ks[0], (D, H1))).astype(f32)
    b1 = (0.1 * jax.random.normal(ks[1], (1, H1))).astype(f32)
    w2 = (0.3 * jax.random.normal(ks[2], (H1, H2))).astype(f32)
    b2 = (0.1 * jax.random.normal(ks[3], (1, H2))).astype(f32)
    w3 = (0.3 * jax.random.normal(ks[4], (H2, L))).astype(f32)
    # B: nn.Linear(D, D+L, bias=False), Koopman: nn.Linear(D+L, D+L, bias=False)
    bw = (0.3 * jax.random.normal(ks[5], (D, LDIM))).astype(f32)
    kw = (0.2 * jax.random.normal(ks[6], (LDIM, LDIM))).astype(f32)

    weights = (w1, b1, w2, b2, w3, bw, kw)

    x = jax.random.normal(ks[7], (N, T, D), dtype=f32)
    u = jax.random.normal(ks[8], (N, T, D), dtype=f32)

    y, y_pred = jax.jit(deina_forward)(x, u, weights)
    jax.block_until_ready((y, y_pred))

    y_ref, y_pred_ref = reference_forward(x, u, weights)
    np.testing.assert_allclose(np.asarray(y), np.asarray(y_ref),
                               rtol=2e-4, atol=2e-4)
    np.testing.assert_allclose(np.asarray(y_pred), np.asarray(y_pred_ref),
                               rtol=2e-4, atol=2e-4)

    print("KERNEL_OK")
</pallas_src>

<mosaic_0001>
module attributes {stable_mosaic.version = 11 : i64} {
  func.func @deina_fused_kernel(%arg0: i32, %arg1: memref<16x4xf32, #tpu.memory_space<vmem>>, %arg2: memref<2x32xf32, #tpu.memory_space<vmem>>, %arg3: memref<4x32xf32, #tpu.memory_space<vmem>>, %arg4: memref<1x32xf32, #tpu.memory_space<vmem>>, %arg5: memref<32x32xf32, #tpu.memory_space<vmem>>, %arg6: memref<1x32xf32, #tpu.memory_space<vmem>>, %arg7: memref<32x8xf32, #tpu.memory_space<vmem>>, %arg8: memref<4x12xf32, #tpu.memory_space<vmem>>, %arg9: memref<12x12xf32, #tpu.memory_space<vmem>>, %arg10: memref<16x12xf32, #tpu.memory_space<vmem>>, %arg11: memref<2x96xf32, #tpu.memory_space<vmem>>) attributes {dimension_semantics = [#tpu.dimension_semantics<parallel>], iteration_bounds = array<i64: 1>, scalar_prefetch = 0 : i64, scratch_operands = 0 : i64, tpu.core_type = #tpu.core_type<tc>, window_params = [{transform_indices = @transform_0, window_bounds = array<i64: 16, 4>}, {transform_indices = @transform_1, window_bounds = array<i64: 2, 32>}, {pipeline_mode = #tpu.pipeline_mode<synchronous>, transform_indices = @transform_2, window_bounds = array<i64: 4, 32>}, {pipeline_mode = #tpu.pipeline_mode<synchronous>, transform_indices = @transform_3, window_bounds = array<i64: 1, 32>}, {pipeline_mode = #tpu.pipeline_mode<synchronous>, transform_indices = @transform_4, window_bounds = array<i64: 32, 32>}, {pipeline_mode = #tpu.pipeline_mode<synchronous>, transform_indices = @transform_5, window_bounds = array<i64: 1, 32>}, {pipeline_mode = #tpu.pipeline_mode<synchronous>, transform_indices = @transform_6, window_bounds = array<i64: 32, 8>}, {pipeline_mode = #tpu.pipeline_mode<synchronous>, transform_indices = @transform_7, window_bounds = array<i64: 4, 12>}, {pipeline_mode = #tpu.pipeline_mode<synchronous>, transform_indices = @transform_8, window_bounds = array<i64: 12, 12>}, {transform_indices = @transform_9, window_bounds = array<i64: 16, 12>}, {transform_indices = @transform_10, window_bounds = array<i64: 2, 96>}]} {
    %c0 = arith.constant 0 : index
    %c0_0 = arith.constant 0 : index
    %0 = vector.load %arg1[%c0, %c0_0] : memref<16x4xf32, #tpu.memory_space<vmem>>, vector<16x4xf32>
    %c0_1 = arith.constant 0 : index
    %c0_2 = arith.constant 0 : index
    %1 = vector.load %arg3[%c0_1, %c0_2] : memref<4x32xf32, #tpu.memory_space<vmem>>, vector<4x32xf32>
    %cst = arith.constant dense<0.000000e+00> : vector<16x32xf32>
    %2 = tpu.matmul %0, %1, %cst {dimension_numbers = #tpu.dot_dimension_numbers<[1], [0], [0], [1], [0, 0, 1, 1], [], []>} : vector<16x4xf32>, vector<4x32xf32>, vector<16x32xf32> -> vector<16x32xf32>
    %c0_3 = arith.constant 0 : index
    %c0_4 = arith.constant 0 : index
    %3 = vector.load %arg4[%c0_3, %c0_4] : memref<1x32xf32, #tpu.memory_space<vmem>>, vector<1x32xf32>
    %4 = vector.broadcast %3 : vector<1x32xf32> to vector<16x32xf32>
    %5 = arith.addf %2, %4 : vector<16x32xf32>
    %cst_5 = arith.constant 0.000000e+00 : f32
    %6 = vector.broadcast %cst_5 : f32 to vector<16x32xf32>
    %7 = arith.maximumf %5, %6 : vector<16x32xf32>
    %c0_6 = arith.constant 0 : index
    %c0_7 = arith.constant 0 : index
    %8 = vector.load %arg5[%c0_6, %c0_7] : memref<32x32xf32, #tpu.memory_space<vmem>>, vector<32x32xf32>
    %cst_8 = arith.constant dense<0.000000e+00> : vector<16x32xf32>
    %9 = tpu.matmul %7, %8, %cst_8 {dimension_numbers = #tpu.dot_dimension_numbers<[1], [0], [0], [1], [0, 0, 1, 1], [], []>} : vector<16x32xf32>, vector<32x32xf32>, vector<16x32xf32> -> vector<16x32xf32>
    %c0_9 = arith.constant 0 : index
    %c0_10 = arith.constant 0 : index
    %10 = vector.load %arg6[%c0_9, %c0_10] : memref<1x32xf32, #tpu.memory_space<vmem>>, vector<1x32xf32>
    %11 = vector.broadcast %10 : vector<1x32xf32> to vector<16x32xf32>
    %12 = arith.addf %9, %11 : vector<16x32xf32>
    %cst_11 = arith.constant 0.000000e+00 : f32
    %13 = vector.broadcast %cst_11 : f32 to vector<16x32xf32>
    %14 = arith.maximumf %12, %13 : vector<16x32xf32>
    %c0_12 = arith.constant 0 : index
    %c0_13 = arith.constant 0 : index
    %15 = vector.load %arg7[%c0_12, %c0_13] : memref<32x8xf32, #tpu.memory_space<vmem>>, vector<32x8xf32>
    %cst_14 = arith.constant dense<0.000000e+00> : vector<16x8xf32>
    %16 = tpu.matmul %14, %15, %cst_14 {dimension_numbers = #tpu.dot_dimension_numbers<[1], [0], [0], [1], [0, 0, 1, 1], [], []>} : vector<16x32xf32>, vector<32x8xf32>, vector<16x8xf32> -> vector<16x8xf32>
    %17 = tpu.concatenate %0, %16 in 1 : vector<16x4xf32>, vector<16x8xf32> -> vector<16x12xf32>
    %c0_15 = arith.constant 0 : index
    %c0_16 = arith.constant 0 : index
    %18 = vector.load %arg10[%c0_15, %c0_16] : memref<16x12xf32, #tpu.memory_space<vmem>>, vector<16x12xf32>
    tpu.vector_store %arg10[%c0_15, %c0_16], %17 {strides = array<i32>} : memref<16x12xf32, #tpu.memory_space<vmem>>, vector<16x12xf32>,
    %c0_17 = arith.constant 0 : index
    %c0_18 = arith.constant 0 : index
    %19 = vector.load %arg9[%c0_17, %c0_18] : memref<12x12xf32, #tpu.memory_space<vmem>>, vector<12x12xf32>
    %c0_19 = arith.constant 0 : index
    %c0_20 = arith.constant 0 : index
    %20 = vector.load %arg8[%c0_19, %c0_20] : memref<4x12xf32, #tpu.memory_space<vmem>>, vector<4x12xf32>
    %c0_21 = arith.constant 0 : index
    %c0_22 = arith.constant 0 : index
    %21 = vector.load %arg2[%c0_21, %c0_22] : memref<2x32xf32, #tpu.memory_space<vmem>>, vector<2x32xf32>
    %c0_23 = arith.constant 0 : index
    %c0_24 = arith.constant 0 : index
    %22 = tpu.strided_load %arg10[%c0_23, %c0_24] {strides = array<i32: 8, 1>} : memref<16x12xf32, #tpu.memory_space<vmem>>, vector<2x12xf32>
    %23 = vector.extract_strided_slice %21 {offsets = [0, 0], sizes = [2, 4], strides = [1, 1]} : vector<2x32xf32> to vector<2x4xf32>
    %cst_25 = arith.constant dense<0.000000e+00> : vector<2x12xf32>
    %24 = tpu.matmul %23, %20, %cst_25 {dimension_numbers = #tpu.dot_dimension_numbers<[1], [0], [0], [1], [0, 0, 1, 1], [], []>} : vector<2x4xf32>, vector<4x12xf32>, vector<2x12xf32> -> vector<2x12xf32>
    %cst_26 = arith.constant dense<0.000000e+00> : vector<2x12xf32>
    %25 = tpu.matmul %22, %19, %cst_26 {dimension_numbers = #tpu.dot_dimension_numbers<[1], [0], [0], [1], [0, 0, 1, 1], [], []>} : vector<2x12xf32>, vector<12x12xf32>, vector<2x12xf32> -> vector<2x12xf32>
    %26 = arith.addf %25, %24 : vector<2x12xf32>
    %27 = vector.extract_strided_slice %21 {offsets = [0, 4], sizes = [2, 4], strides = [1, 1]} : vector<2x32xf32> to vector<2x4xf32>
    %cst_27 = arith.constant dense<0.000000e+00> : vector<2x12xf32>
    %28 = tpu.matmul %27, %20, %cst_27 {dimension_numbers = #tpu.dot_dimension_numbers<[1], [0], [0], [1], [0, 0, 1, 1], [], []>} : vector<2x4xf32>, vector<4x12xf32>, vector<2x12xf32> -> vector<2x12xf32>
    %cst_28 = arith.constant dense<0.000000e+00> : vector<2x12xf32>
    %29 = tpu.matmul %26, %19, %cst_28 {dimension_numbers = #tpu.dot_dimension_numbers<[1], [0], [0], [1], [0, 0, 1, 1], [], []>} : vector<2x12xf32>, vector<12x12xf32>, vector<2x12xf32> -> vector<2x12xf32>
    %30 = arith.addf %29, %28 : vector<2x12xf32>
    %31 = vector.extract_strided_slice %21 {offsets = [0, 8], sizes = [2, 4], strides = [1, 1]} : vector<2x32xf32> to vector<2x4xf32>
    %cst_29 = arith.constant dense<0.000000e+00> : vector<2x12xf32>
    %32 = tpu.matmul %31, %20, %cst_29 {dimension_numbers = #tpu.dot_dimension_numbers<[1], [0], [0], [1], [0, 0, 1, 1], [], []>} : vector<2x4xf32>, vector<4x12xf32>, vector<2x12xf32> -> vector<2x12xf32>
    %cst_30 = arith.constant dense<0.000000e+00> : vector<2x12xf32>
    %33 = tpu.matmul %30, %19, %cst_30 {dimension_numbers = #tpu.dot_dimension_numbers<[1], [0], [0], [1], [0, 0, 1, 1], [], []>} : vector<2x12xf32>, vector<12x12xf32>, vector<2x12xf32> -> vector<2x12xf32>
    %34 = arith.addf %33, %32 : vector<2x12xf32>
    %35 = vector.extract_strided_slice %21 {offsets = [0, 12], sizes = [2, 4], strides = [1, 1]} : vector<2x32xf32> to vector<2x4xf32>
    %cst_31 = arith.constant dense<0.000000e+00> : vector<2x12xf32>
    %36 = tpu.matmul %35, %20, %cst_31 {dimension_numbers = #tpu.dot_dimension_numbers<[1], [0], [0], [1], [0, 0, 1, 1], [], []>} : vector<2x4xf32>, vector<4x12xf32>, vector<2x12xf32> -> vector<2x12xf32>
    %cst_32 = arith.constant dense<0.000000e+00> : vector<2x12xf32>
    %37 = tpu.matmul %34, %19, %cst_32 {dimension_numbers = #tpu.dot_dimension_numbers<[1], [0], [0], [1], [0, 0, 1, 1], [], []>} : vector<2x12xf32>, vector<12x12xf32>, vector<2x12xf32> -> vector<2x12xf32>
    %38 = arith.addf %37, %36 : vector<2x12xf32>
    %39 = vector.extract_strided_slice %21 {offsets = [0, 16], sizes = [2, 4], strides = [1, 1]} : vector<2x32xf32> to vector<2x4xf32>
    %cst_33 = arith.constant dense<0.000000e+00> : vector<2x12xf32>
    %40 = tpu.matmul %39, %20, %cst_33 {dimension_numbers = #tpu.dot_dimension_numbers<[1], [0], [0], [1], [0, 0, 1, 1], [], []>} : vector<2x4xf32>, vector<4x12xf32>, vector<2x12xf32> -> vector<2x12xf32>
    %cst_34 = arith.constant dense<0.000000e+00> : vector<2x12xf32>
    %41 = tpu.matmul %38, %19, %cst_34 {dimension_numbers = #tpu.dot_dimension_numbers<[1], [0], [0], [1], [0, 0, 1, 1], [], []>} : vector<2x12xf32>, vector<12x12xf32>, vector<2x12xf32> -> vector<2x12xf32>
    %42 = arith.addf %41, %40 : vector<2x12xf32>
    %43 = vector.extract_strided_slice %21 {offsets = [0, 20], sizes = [2, 4], strides = [1, 1]} : vector<2x32xf32> to vector<2x4xf32>
    %cst_35 = arith.constant dense<0.000000e+00> : vector<2x12xf32>
    %44 = tpu.matmul %43, %20, %cst_35 {dimension_numbers = #tpu.dot_dimension_numbers<[1], [0], [0], [1], [0, 0, 1, 1], [], []>} : vector<2x4xf32>, vector<4x12xf32>, vector<2x12xf32> -> vector<2x12xf32>
    %cst_36 = arith.constant dense<0.000000e+00> : vector<2x12xf32>
    %45 = tpu.matmul %42, %19, %cst_36 {dimension_numbers = #tpu.dot_dimension_numbers<[1], [0], [0], [1], [0, 0, 1, 1], [], []>} : vector<2x12xf32>, vector<12x12xf32>, vector<2x12xf32> -> vector<2x12xf32>
    %46 = arith.addf %45, %44 : vector<2x12xf32>
    %47 = vector.extract_strided_slice %21 {offsets = [0, 24], sizes = [2, 4], strides = [1, 1]} : vector<2x32xf32> to vector<2x4xf32>
    %cst_37 = arith.constant dense<0.000000e+00> : vector<2x12xf32>
    %48 = tpu.matmul %47, %20, %cst_37 {dimension_numbers = #tpu.dot_dimension_numbers<[1], [0], [0], [1], [0, 0, 1, 1], [], []>} : vector<2x4xf32>, vector<4x12xf32>, vector<2x12xf32> -> vector<2x12xf32>
    %cst_38 = arith.constant dense<0.000000e+00> : vector<2x12xf32>
    %49 = tpu.matmul %46, %19, %cst_38 {dimension_numbers = #tpu.dot_dimension_numbers<[1], [0], [0], [1], [0, 0, 1, 1], [], []>} : vector<2x12xf32>, vector<12x12xf32>, vector<2x12xf32> -> vector<2x12xf32>
    %50 = arith.addf %49, %48 : vector<2x12xf32>
    %51 = tpu.concatenate %22, %26, %30, %34, %38, %42, %46, %50 in 1 : vector<2x12xf32>, vector<2x12xf32>, vector<2x12xf32>, vector<2x12xf32>, vector<2x12xf32>, vector<2x12xf32>, vector<2x12xf32>, vector<2x12xf32> -> vector<2x96xf32>
    %c0_39 = arith.constant 0 : index
    %c0_40 = arith.constant 0 : index
    %52 = vector.load %arg11[%c0_39, %c0_40] : memref<2x96xf32, #tpu.memory_space<vmem>>, vector<2x96xf32>
    tpu.vector_store %arg11[%c0_39, %c0_40], %51 {strides = array<i32>} : memref<2x96xf32, #tpu.memory_space<vmem>>, vector<2x96xf32>,
    return
  }
  func.func @transform_0(%arg0: i32) -> (i32, i32) {
    %c0_i32 = arith.constant 0 : i32
    %c0_i32_0 = arith.constant 0 : i32
    return %arg0, %c0_i32 : i32, i32
  }
  func.func @transform_1(%arg0: i32) -> (i32, i32) {
    %c0_i32 = arith.constant 0 : i32
    %c0_i32_0 = arith.constant 0 : i32
    return %arg0, %c0_i32 : i32, i32
  }
  func.func @transform_2(%arg0: i32) -> (i32, i32) {
    %c0_i32 = arith.constant 0 : i32
    %c0_i32_0 = arith.constant 0 : i32
    %c0_i32_1 = arith.constant 0 : i32
    return %c0_i32, %c0_i32_0 : i32, i32
  }
  func.func @transform_3(%arg0: i32) -> (i32, i32) {
    %c0_i32 = arith.constant 0 : i32
    %c0_i32_0 = arith.constant 0 : i32
    %c0_i32_1 = arith.constant 0 : i32
    return %c0_i32, %c0_i32_0 : i32, i32
  }
  func.func @transform_4(%arg0: i32) -> (i32, i32) {
    %c0_i32 = arith.constant 0 : i32
    %c0_i32_0 = arith.constant 0 : i32
    %c0_i32_1 = arith.constant 0 : i32
    return %c0_i32, %c0_i32_0 : i32, i32
  }
  func.func @transform_5(%arg0: i32) -> (i32, i32) {
    %c0_i32 = arith.constant 0 : i32
    %c0_i32_0 = arith.constant 0 : i32
    %c0_i32_1 = arith.constant 0 : i32
    return %c0_i32, %c0_i32_0 : i32, i32
  }
  func.func @transform_6(%arg0: i32) -> (i32, i32) {
    %c0_i32 = arith.constant 0 : i32
    %c0_i32_0 = arith.constant 0 : i32
    %c0_i32_1 = arith.constant 0 : i32
    return %c0_i32, %c0_i32_0 : i32, i32
  }
  func.func @transform_7(%arg0: i32) -> (i32, i32) {
    %c0_i32 = arith.constant 0 : i32
    %c0_i32_0 = arith.constant 0 : i32
    %c0_i32_1 = arith.constant 0 : i32
    return %c0_i32, %c0_i32_0 : i32, i32
  }
  func.func @transform_8(%arg0: i32) -> (i32, i32) {
    %c0_i32 = arith.constant 0 : i32
    %c0_i32_0 = arith.constant 0 : i32
    %c0_i32_1 = arith.constant 0 : i32
    return %c0_i32, %c0_i32_0 : i32, i32
  }
  func.func @transform_9(%arg0: i32) -> (i32, i32) {
    %c0_i32 = arith.constant 0 : i32
    %c0_i32_0 = arith.constant 0 : i32
    return %arg0, %c0_i32 : i32, i32
  }
  func.func @transform_10(%arg0: i32) -> (i32, i32) {
    %c0_i32 = arith.constant 0 : i32
    %c0_i32_0 = arith.constant 0 : i32
    return %arg0, %c0_i32 : i32, i32
  }
}

</mosaic_0001>

<llo_original>
// kernel: deina_forward.1
$region0: #{deina_forward.1}
  #allocation0 [shape = 'u32[]', space=smem, size = 0x4, offset = 0x4, fixed_abs, tag = 'smem constant byte address 0x4 - core index']
  #allocation1 [shape = 'u32[144,128]{1,0:T(1,128)}', space=vmem, size = 0x12000, scoped, tag = 'internal scratch']
  %s0 = inlined_call_operand.vmem [shape: f32[16,4], index: 0, kind: input, shape index: {}]
  %s1 = inlined_call_operand.vmem [shape: f32[2,32], index: 1, kind: input, shape index: {}]
  %s2 = inlined_call_operand.vmem [shape: f32[4,32], index: 2, kind: input, shape index: {}]
  %s3 = inlined_call_operand.vmem [shape: f32[1,32], index: 3, kind: input, shape index: {}]
  %s4 = inlined_call_operand.vmem [shape: f32[32,32], index: 4, kind: input, shape index: {}]
  %s5 = inlined_call_operand.vmem [shape: f32[1,32], index: 5, kind: input, shape index: {}]
  %s6 = inlined_call_operand.vmem [shape: f32[32,8], index: 6, kind: input, shape index: {}]
  %s7 = inlined_call_operand.vmem [shape: f32[4,12], index: 7, kind: input, shape index: {}]
  %s8 = inlined_call_operand.vmem [shape: f32[12,12], index: 8, kind: input, shape index: {}]
  %s9 = inlined_call_operand.hbm [shape: f32[16,12], index: 9, kind: output, shape index: {0}]
  %s10 = inlined_call_operand.vmem [shape: f32[2,96], index: 10, kind: output, shape index: {1}]
  %11 = xla_tuple %s9, %s10
  %s12 = sld [smem:[#allocation0]]
  $region54: #{deina_forward.1} parent=0
    _
  %s14 = ssub.s32 1, %s12
  %s15 = scalar_select 0, %s14, %s12
  $region1: #{deina_forward.1} parent=0
    #allocation2 [shape = 'u8[8192]{0}', space=vmem, size = 0x2000, scoped, tag = 'output window, operand 0, single buffered']
    #allocation3 [shape = 's32[1]{0}', space=sflag, size = 0x4, scoped, tag = 'scoped memory for deina_forward.1']
    %16 = vsyncpa [#allocation3], 0
    // Predicated region
    $region2: #{deina_forward.1} parent=1 // pred_check
      _
    $region3: #{deina_forward.1} parent=1 // pred_check_branch
      %18 = sbr.rel (0) target = $region5
    $region4: #{deina_forward.1} parent=1 // pred_region
      _
    $region5: #{deina_forward.1} parent=1 // pred_fallthru
      _
    // Predicated region
    $region6: #{deina_forward.1} parent=1 // pred_check
      _
    $region7: #{deina_forward.1} parent=1 // pred_check_branch
      %20 = sbr.rel (0) target = $region9
    $region8: #{deina_forward.1} parent=1 // pred_region
      _
    $region9: #{deina_forward.1} parent=1 // pred_fallthru
      _
    // Predicated region
    $region10: #{deina_forward.1} parent=1 // pred_check
      _
    $region11: #{deina_forward.1} parent=1 // pred_check_branch
      %22 = sbr.rel (0) target = $region13
    $region12: #{deina_forward.1} parent=1 // pred_region
      _
    $region13: #{deina_forward.1} parent=1 // pred_fallthru
      _
    // Predicated region
    $region14: #{deina_forward.1} parent=1 // pred_check
      _
    $region15: #{deina_forward.1} parent=1 // pred_check_branch
      %24 = sbr.rel (0) target = $region17
    $region16: #{deina_forward.1} parent=1 // pred_region
      _
    $region17: #{deina_forward.1} parent=1 // pred_fallthru
      _
    // Predicated region
    $region18: #{deina_forward.1} parent=1 // pred_check
      _
    $region19: #{deina_forward.1} parent=1 // pred_check_branch
      %26 = sbr.rel (0) target = $region21
    $region20: #{deina_forward.1} parent=1 // pred_region
      _
    $region21: #{deina_forward.1} parent=1 // pred_fallthru
      _
    // Predicated region
    $region22: #{deina_forward.1} parent=1 // pred_check
      _
    $region23: #{deina_forward.1} parent=1 // pred_check_branch
      %28 = sbr.rel (0) target = $region25
    $region24: #{deina_forward.1} parent=1 // pred_region
      _
    $region25: #{deina_forward.1} parent=1 // pred_fallthru
      _
    // Predicated region
    $region26: #{deina_forward.1} parent=1 // pred_check
      _
    $region27: #{deina_forward.1} parent=1 // pred_check_branch
      %30 = sbr.rel (0) target = $region29
    $region28: #{deina_forward.1} parent=1 // pred_region
      _
    $region29: #{deina_forward.1} parent=1 // pred_fallthru
      _
    // Predicated region
    $region30: #{deina_forward.1} parent=1 // pred_check
      _
    $region31: #{deina_forward.1} parent=1 // pred_check_branch
      %32 = sbr.rel (0) target = $region33
    $region32: #{deina_forward.1} parent=1 // pred_region
      _
    $region33: #{deina_forward.1} parent=1 // pred_fallthru
      _
    // Predicated region
    $region34: #{deina_forward.1} parent=1 // pred_check
      _
    $region35: #{deina_forward.1} parent=1 // pred_check_branch
      %34 = sbr.rel (0) target = $region37
    $region36: #{deina_forward.1} parent=1 // pred_region
      _
    $region37: #{deina_forward.1} parent=1 // pred_fallthru
      _
    %v35 = vld [vmem:[%s0] sm:$0xff]
    %v36 = vld [vmem:[%s0 + $0x8] sm:$0xff]
    %v37 = vld [vmem:[%s2] sm:$0xf]
    %v38 = vld [vmem:[%s3] sm:$0x1]
    %v40 = vlaneseq
    %v41 = vshrl.u32 %v40, 7
    %v42 = vsub.s32 0, %v41
    %v43 = vrot.slane %v38, %v42
    %vm45 = vcmask 31744
    %v47 = vsel %vm45, %v35, 0
    %v50 = vsel %vm45, %v36, 0
    %vm52 = vcmask 1043456
    %v54 = vsel %vm52, %v37, 0
    %56 = vmatprep.subr.mxu0 0.0
    %57 = vmatpush1.msra.mxu0 %v54
    %58 = vmatprep.subr.mxu0 0.0
    %59 = vmatpush1.msra.mxu0 0.0
    %60 = vmatprep.subr.mxu0 0.0
    %61 = vmatpush1.msra.mxu0 0.0
    %62 = vmatprep.subr.mxu0 0.0
    %63 = vmatpush1.msra.mxu0 0.0
    %64 = vmatprep.subr.mxu0 0.0
    %65 = vmatpush1.msra.mxu0 0.0
    %66 = vmatprep.subr.mxu0 0.0
    %67 = vmatpush1.msra.mxu0 0.0
    %68 = vmatprep.subr.mxu0 0.0
    %69 = vmatpush1.msra.mxu0 0.0
    %70 = vmatprep.subr.mxu0 0.0
    %71 = vmatpush1.msra.mxu0 0.0
    %72 = vmatprep.subr.mxu0 0.0
    %73 = vmatpush1.msra.mxu0 0.0
    %74 = vmatprep.subr.mxu0 0.0
    %75 = vmatpush1.msra.mxu0 0.0
    %76 = vmatprep.subr.mxu0 0.0
    %77 = vmatpush1.msra.mxu0 0.0
    %78 = vmatprep.subr.mxu0 0.0
    %79 = vmatpush1.msra.mxu0 0.0
    %80 = vmatprep.subr.mxu0 0.0
    %81 = vmatpush1.msra.mxu0 0.0
    %82 = vmatprep.subr.mxu0 0.0
    %83 = vmatpush1.msra.mxu0 0.0
    %84 = vmatprep.subr.mxu0 0.0
    %85 = vmatpush1.msra.mxu0 0.0
    %86 = vmatprep.subr.mxu0 0.0
    %87 = vmatpush1.msra.mxu0 0.0
    %88 = vmatprep.subr.mxu0 0.0
    %89 = vmatpush1.msra.mxu0 0.0
    %90 = vmatprep.subr.mxu0 0.0
    %91 = vmatpush1.msra.mxu0 0.0
    %92 = vmatprep.subr.mxu0 0.0
    %93 = vmatpush1.msra.mxu0 0.0
    %94 = vmatprep.subr.mxu0 0.0
    %95 = vmatpush1.msra.mxu0 0.0
    %96 = vmatprep.subr.mxu0 0.0
    %97 = vmatpush1.msra.mxu0 0.0
    %98 = vmatprep.subr.mxu0 0.0
    %99 = vmatpush1.msra.mxu0 0.0
    %100 = vmatprep.subr.mxu0 0.0
    %101 = vmatpush1.msra.mxu0 0.0
    %102 = vmatprep.subr.mxu0 0.0
    %103 = vmatpush1.msra.mxu0 0.0
    %104 = vmatprep.subr.mxu0 0.0
    %105 = vmatpush1.msra.mxu0 0.0
    %106 = vmatprep.subr.mxu0 0.0
    %107 = vmatpush1.msra.mxu0 0.0
    %108 = vmatprep.subr.mxu0 0.0
    %109 = vmatpush1.msra.mxu0 0.0
    %110 = vmatprep.subr.mxu0 0.0
    %111 = vmatpush1.msra.mxu0 0.0
    %112 = vmatprep.subr.mxu0 0.0
    %113 = vmatpush1.msra.mxu0 0.0
    %114 = vmatprep.subr.mxu0 0.0
    %115 = vmatpush1.msra.mxu0 0.0
    %116 = vmatprep.subr.mxu0 0.0
    %117 = vmatpush1.msra.mxu0 0.0
    %118 = vmatprep.subr.mxu0 0.0
    %119 = vmatpush1.msra.mxu0 0.0
    %120 = vmatprep.mubr.f32.mxu0 0.0
    %121 = vmatmul.mubr.f32.gmra.mrb[0].mxu0 %v47
    %v122 = vpop.f32.mrb[0].mxu0
    %v123 = vadd.f32 %v43, %v122
    %v124 = vpop.f32.mrb[0].mxu0
    %125 = vmatprep.mubr.f32.mxu0 0.0
    %126 = vmatmul.mubr.f32.gmra.mrb[0].mxu0 %v50
    %v127 = vpop.f32.mrb[0].mxu0
    %v128 = vadd.f32 %v43, %v127
    %v129 = vpop.f32.mrb[0].mxu0
    %130 = vdwg.mxu0
    %v131 = vmax.f32 %v123, 0.0
    %v132 = vmax.f32 %v128, 0.0
    %v133 = vld [vmem:[%s4] sm:$0xff]
    %v134 = vld [vmem:[%s4 + $0x8] sm:$0xff]
    %v135 = vld [vmem:[%s4 + $0x10] sm:$0xff]
    %v136 = vld [vmem:[%s4 + $0x18] sm:$0xff]
    %v137 = vld [vmem:[%s5] sm:$0x1]
    %v139 = vlaneseq
    %v140 = vshrl.u32 %v139, 7
    %v141 = vsub.s32 0, %v140
    %v142 = vrot.slane %v137, %v141
    %vm144 = vcmask 261120
    %v146 = vsel %vm144, %v131, 0
    %v149 = vsel %vm144, %v132, 0
    %151 = vmatprep.subr.mxu0 0.0
    %152 = vmatpush1.msra.mxu0 %v133
    %153 = vmatprep.subr.mxu0 0.0
    %154 = vmatpush1.msra.mxu0 %v134
    %155 = vmatprep.subr.mxu0 0.0
    %156 = vmatpush1.msra.mxu0 %v135
    %157 = vmatprep.subr.mxu0 0.0
    %158 = vmatpush1.msra.mxu0 %v136
    %159 = vmatprep.subr.mxu0 0.0
    %160 = vmatpush1.msra.mxu0 0.0
    %161 = vmatprep.subr.mxu0 0.0
    %162 = vmatpush1.msra.mxu0 0.0
    %163 = vmatprep.subr.mxu0 0.0
    %164 = vmatpush1.msra.mxu0 0.0
    %165 = vmatprep.subr.mxu0 0.0
    %166 = vmatpush1.msra.mxu0 0.0
    %167 = vmatprep.subr.mxu0 0.0
    %168 = vmatpush1.msra.mxu0 0.0
    %169 = vmatprep.subr.mxu0 0.0
    %170 = vmatpush1.msra.mxu0 0.0
    %171 = vmatprep.subr.mxu0 0.0
    %172 = vmatpush1.msra.mxu0 0.0
    %173 = vmatprep.subr.mxu0 0.0
    %174 = vmatpush1.msra.mxu0 0.0
    %175 = vmatprep.subr.mxu0 0.0
    %176 = vmatpush1.msra.mxu0 0.0
    %177 = vmatprep.subr.mxu0 0.0
    %178 = vmatpush1.msra.mxu0 0.0
    %179 = vmatprep.subr.mxu0 0.0
    %180 = vmatpush1.msra.mxu0 0.0
    %181 = vmatprep.subr.mxu0 0.0
    %182 = vmatpush1.msra.mxu0 0.0
    %183 = vmatprep.subr.mxu0 0.0
    %184 = vmatpush1.msra.mxu0 0.0
    %185 = vmatprep.subr.mxu0 0.0
    %186 = vmatpush1.msra.mxu0 0.0
    %187 = vmatprep.subr.mxu0 0.0
    %188 = vmatpush1.msra.mxu0 0.0
    %189 = vmatprep.subr.mxu0 0.0
    %190 = vmatpush1.msra.mxu0 0.0
    %191 = vmatprep.subr.mxu0 0.0
    %192 = vmatpush1.msra.mxu0 0.0
    %193 = vmatprep.subr.mxu0 0.0
    %194 = vmatpush1.msra.mxu0 0.0
    %195 = vmatprep.subr.mxu0 0.0
    %196 = vmatpush1.msra.mxu0 0.0
    %197 = vmatprep.subr.mxu0 0.0
    %198 = vmatpush1.msra.mxu0 0.0
    %199 = vmatprep.subr.mxu0 0.0
    %200 = vmatpush1.msra.mxu0 0.0
    %201 = vmatprep.subr.mxu0 0.0
    %202 = vmatpush1.msra.mxu0 0.0
    %203 = vmatprep.subr.mxu0 0.0
    %204 = vmatpush1.msra.mxu0 0.0
    %205 = vmatprep.subr.mxu0 0.0
    %206 = vmatpush1.msra.mxu0 0.0
    %207 = vmatprep.subr.mxu0 0.0
    %208 = vmatpush1.msra.mxu0 0.0
    %209 = vmatprep.subr.mxu0 0.0
    %210 = vmatpush1.msra.mxu0 0.0
    %211 = vmatprep.subr.mxu0 0.0
    %212 = vmatpush1.msra.mxu0 0.0
    %213 = vmatprep.subr.mxu0 0.0
    %214 = vmatpush1.msra.mxu0 0.0
    %215 = vmatprep.mubr.f32.mxu0 0.0
    %216 = vmatmul.mubr.f32.gmra.mrb[0].mxu0 %v146
    %v217 = vpop.f32.mrb[0].mxu0
    %v218 = vadd.f32 %v142, %v217
    %v219 = vpop.f32.mrb[0].mxu0
    %220 = vmatprep.mubr.f32.mxu0 0.0
    %221 = vmatmul.mubr.f32.gmra.mrb[0].mxu0 %v149
    %v222 = vpop.f32.mrb[0].mxu0
    %v223 = vadd.f32 %v142, %v222
    %v224 = vpop.f32.mrb[0].mxu0
    %225 = vdwg.mxu0
    %v226 = vmax.f32 %v218, 0.0
    %v227 = vmax.f32 %v223, 0.0
    %v228 = vld [vmem:[%s6] sm:$0xff]
    %v229 = vld [vmem:[%s6 + $0x8] sm:$0xff]
    %v230 = vld [vmem:[%s6 + $0x10] sm:$0xff]
    %v231 = vld [vmem:[%s6 + $0x18] sm:$0xff]
    %v233 = vsel %vm144, %v226, 0
    %v236 = vsel %vm144, %v227, 0
    %238 = vmatprep.subr.mxu0 0.0
    %239 = vmatpush1.msra.mxu0 %v228
    %240 = vmatprep.subr.mxu0 0.0
    %241 = vmatpush1.msra.mxu0 %v229
    %242 = vmatprep.subr.mxu0 0.0
    %243 = vmatpush1.msra.mxu0 %v230
    %244 = vmatprep.subr.mxu0 0.0
    %245 = vmatpush1.msra.mxu0 %v231
    %246 = vmatprep.subr.mxu0 0.0
    %247 = vmatpush1.msra.mxu0 0.0
    %248 = vmatprep.subr.mxu0 0.0
    %249 = vmatpush1.msra.mxu0 0.0
    %250 = vmatprep.subr.mxu0 0.0
    %251 = vmatpush1.msra.mxu0 0.0
    %252 = vmatprep.subr.mxu0 0.0
    %253 = vmatpush1.msra.mxu0 0.0
    %254 = vmatprep.subr.mxu0 0.0
    %255 = vmatpush1.msra.mxu0 0.0
    %256 = vmatprep.subr.mxu0 0.0
    %257 = vmatpush1.msra.mxu0 0.0
    %258 = vmatprep.subr.mxu0 0.0
    %259 = vmatpush1.msra.mxu0 0.0
    %260 = vmatprep.subr.mxu0 0.0
    %261 = vmatpush1.msra.mxu0 0.0
    %262 = vmatprep.subr.mxu0 0.0
    %263 = vmatpush1.msra.mxu0 0.0
    %264 = vmatprep.subr.mxu0 0.0
    %265 = vmatpush1.msra.mxu0 0.0
    %266 = vmatprep.subr.mxu0 0.0
    %267 = vmatpush1.msra.mxu0 0.0
    %268 = vmatprep.subr.mxu0 0.0
    %269 = vmatpush1.msra.mxu0 0.0
    %270 = vmatprep.subr.mxu0 0.0
    %271 = vmatpush1.msra.mxu0 0.0
    %272 = vmatprep.subr.mxu0 0.0
    %273 = vmatpush1.msra.mxu0 0.0
    %274 = vmatprep.subr.mxu0 0.0
    %275 = vmatpush1.msra.mxu0 0.0
    %276 = vmatprep.subr.mxu0 0.0
    %277 = vmatpush1.msra.mxu0 0.0
    %278 = vmatprep.subr.mxu0 0.0
    %279 = vmatpush1.msra.mxu0 0.0
    %280 = vmatprep.subr.mxu0 0.0
    %281 = vmatpush1.msra.mxu0 0.0
    %282 = vmatprep.subr.mxu0 0.0
    %283 = vmatpush1.msra.mxu0 0.0
    %284 = vmatprep.subr.mxu0 0.0
    %285 = vmatpush1.msra.mxu0 0.0
    %286 = vmatprep.subr.mxu0 0.0
    %287 = vmatpush1.msra.mxu0 0.0
    %288 = vmatprep.subr.mxu0 0.0
    %289 = vmatpush1.msra.mxu0 0.0
    %290 = vmatprep.subr.mxu0 0.0
    %291 = vmatpush1.msra.mxu0 0.0
    %292 = vmatprep.subr.mxu0 0.0
    %293 = vmatpush1.msra.mxu0 0.0
    %294 = vmatprep.subr.mxu0 0.0
    %295 = vmatpush1.msra.mxu0 0.0
    %296 = vmatprep.subr.mxu0 0.0
    %297 = vmatpush1.msra.mxu0 0.0
    %298 = vmatprep.subr.mxu0 0.0
    %299 = vmatpush1.msra.mxu0 0.0
    %300 = vmatprep.subr.mxu0 0.0
    %301 = vmatpush1.msra.mxu0 0.0
    %302 = vmatprep.mubr.f32.mxu0 0.0
    %303 = vmatmul.mubr.f32.gmra.mrb[0].mxu0 %v233
    %v304 = vpop.f32.mrb[0].mxu0
    %v305 = vadd.f32 0.0, %v304
    %v306 = vpop.f32.mrb[0].mxu0
    %307 = vmatprep.mubr.f32.mxu0 0.0
    %308 = vmatmul.mubr.f32.gmra.mrb[0].mxu0 %v236
    %v309 = vpop.f32.mrb[0].mxu0
    %v310 = vadd.f32 0.0, %v309
    %v311 = vpop.f32.mrb[0].mxu0
    %312 = vdwg.mxu0
    %315 = vrot.lane.b32.xlu0 %v305, 4
    %v316 = vpop.permute.xlu0 %315
    %317 = vrot.lane.b32.xlu0 %v310, 4
    %v318 = vpop.permute.xlu0 %317
    %v321 = vsel %vm45, %v35, %v316
    %v322 = vsel %vm45, %v36, %v318
    %vm323 = vcmask 97280
    %324 = vst.msk [vmem:[#allocation2] sm:$0xff] %vm323, %v321
    %325 = vst.msk [vmem:[#allocation2 + $0x8] sm:$0xff] %vm323, %v322
    %v326 = vld [vmem:[%s8] sm:$0xff]
    %v327 = vld [vmem:[%s8 + $0x8] sm:$0xf]
    %v328 = vld [vmem:[%s7] sm:$0xf]
    %v329 = vld [vmem:[%s1] sm:$0x3]
    %v330 = vld [vmem:[#allocation2] ss:$8 sm:$0x3]
    %v332 = vsel %vm45, %v329, 0
    %v335 = vsel %vm52, %v328, 0
    %337 = vmatprep.subr.mxu0 0.0
    %338 = vmatpush1.msra.mxu0 %v335
    %339 = vmatprep.subr.mxu0 0.0
    %340 = vmatpush1.msra.mxu0 0.0
    %341 = vmatprep.subr.mxu0 0.0
    %342 = vmatpush1.msra.mxu0 0.0
    %343 = vmatprep.subr.mxu0 0.0
    %344 = vmatpush1.msra.mxu0 0.0
    %345 = vmatprep.subr.mxu0 0.0
    %346 = vmatpush1.msra.mxu0 0.0
    %347 = vmatprep.subr.mxu0 0.0
    %348 = vmatpush1.msra.mxu0 0.0
    %349 = vmatprep.subr.mxu0 0.0
    %350 = vmatpush1.msra.mxu0 0.0
    %351 = vmatprep.subr.mxu0 0.0
    %352 = vmatpush1.msra.mxu0 0.0
    %353 = vmatprep.subr.mxu0 0.0
    %354 = vmatpush1.msra.mxu0 0.0
    %355 = vmatprep.subr.mxu0 0.0
    %356 = vmatpush1.msra.mxu0 0.0
    %357 = vmatprep.subr.mxu0 0.0
    %358 = vmatpush1.msra.mxu0 0.0
    %359 = vmatprep.subr.mxu0 0.0
    %360 = vmatpush1.msra.mxu0 0.0
    %361 = vmatprep.subr.mxu0 0.0
    %362 = vmatpush1.msra.mxu0 0.0
    %363 = vmatprep.subr.mxu0 0.0
    %364 = vmatpush1.msra.mxu0 0.0
    %365 = vmatprep.subr.mxu0 0.0
    %366 = vmatpush1.msra.mxu0 0.0
    %367 = vmatprep.subr.mxu0 0.0
    %368 = vmatpush1.msra.mxu0 0.0
    %369 = vmatprep.subr.mxu0 0.0
    %370 = vmatpush1.msra.mxu0 0.0
    %371 = vmatprep.subr.mxu0 0.0
    %372 = vmatpush1.msra.mxu0 0.0
    %373 = vmatprep.subr.mxu0 0.0
    %374 = vmatpush1.msra.mxu0 0.0
    %375 = vmatprep.subr.mxu0 0.0
    %376 = vmatpush1.msra.mxu0 0.0
    %377 = vmatprep.subr.mxu0 0.0
    %378 = vmatpush1.msra.mxu0 0.0
    %379 = vmatprep.subr.mxu0 0.0
    %380 = vmatpush1.msra.mxu0 0.0
    %381 = vmatprep.subr.mxu0 0.0
    %382 = vmatpush1.msra.mxu0 0.0
    %383 = vmatprep.subr.mxu0 0.0
    %384 = vmatpush1.msra.mxu0 0.0
    %385 = vmatprep.subr.mxu0 0.0
    %386 = vmatpush1.msra.mxu0 0.0
    %387 = vmatprep.subr.mxu0 0.0
    %388 = vmatpush1.msra.mxu0 0.0
    %389 = vmatprep.subr.mxu0 0.0
    %390 = vmatpush1.msra.mxu0 0.0
    %391 = vmatprep.subr.mxu0 0.0
    %392 = vmatpush1.msra.mxu0 0.0
    %393 = vmatprep.subr.mxu0 0.0
    %394 = vmatpush1.msra.mxu0 0.0
    %395 = vmatprep.subr.mxu0 0.0
    %396 = vmatpush1.msra.mxu0 0.0
    %397 = vmatprep.subr.mxu0 0.0
    %398 = vmatpush1.msra.mxu0 0.0
    %399 = vmatprep.subr.mxu0 0.0
    %400 = vmatpush1.msra.mxu0 0.0
    %401 = vmatprep.mubr.f32.mxu0 0.0
    %402 = vmatmul.mubr.f32.gmra.mrb[0].mxu0 %v332
    %v403 = vpop.f32.mrb[0].mxu0
    %v404 = vadd.f32 0.0, %v403
    %v405 = vpop.f32.mrb[0].mxu0
    %406 = vdwg.mxu0
    %v408 = vsel %vm323, %v330, 0
    %v411 = vsel %vm52, %v327, 0
    %413 = vmatprep.subr.mxu0 0.0
    %414 = vmatpush1.msra.mxu0 %v326
    %415 = vmatprep.subr.mxu0 0.0
    %416 = vmatpush1.msra.mxu0 %v411
    %417 = vmatprep.subr.mxu0 0.0
    %418 = vmatpush1.msra.mxu0 0.0
    %419 = vmatprep.subr.mxu0 0.0
    %420 = vmatpush1.msra.mxu0 0.0
    %421 = vmatprep.subr.mxu0 0.0
    %422 = vmatpush1.msra.mxu0 0.0
    %423 = vmatprep.subr.mxu0 0.0
    %424 = vmatpush1.msra.mxu0 0.0
    %425 = vmatprep.subr.mxu0 0.0
    %426 = vmatpush1.msra.mxu0 0.0
    %427 = vmatprep.subr.mxu0 0.0
    %428 = vmatpush1.msra.mxu0 0.0
    %429 = vmatprep.subr.mxu0 0.0
    %430 = vmatpush1.msra.mxu0 0.0
    %431 = vmatprep.subr.mxu0 0.0
    %432 = vmatpush1.msra.mxu0 0.0
    %433 = vmatprep.subr.mxu0 0.0
    %434 = vmatpush1.msra.mxu0 0.0
    %435 = vmatprep.subr.mxu0 0.0
    %436 = vmatpush1.msra.mxu0 0.0
    %437 = vmatprep.subr.mxu0 0.0
    %438 = vmatpush1.msra.mxu0 0.0
    %439 = vmatprep.subr.mxu0 0.0
    %440 = vmatpush1.msra.mxu0 0.0
    %441 = vmatprep.subr.mxu0 0.0
    %442 = vmatpush1.msra.mxu0 0.0
    %443 = vmatprep.subr.mxu0 0.0
    %444 = vmatpush1.msra.mxu0 0.0
    %445 = vmatprep.subr.mxu0 0.0
    %446 = vmatpush1.msra.mxu0 0.0
    %447 = vmatprep.subr.mxu0 0.0
    %448 = vmatpush1.msra.mxu0 0.0
    %449 = vmatprep.subr.mxu0 0.0
    %450 = vmatpush1.msra.mxu0 0.0
    %451 = vmatprep.subr.mxu0 0.0
    %452 = vmatpush1.msra.mxu0 0.0
    %453 = vmatprep.subr.mxu0 0.0
    %454 = vmatpush1.msra.mxu0 0.0
    %455 = vmatprep.subr.mxu0 0.0
    %456 = vmatpush1.msra.mxu0 0.0
    %457 = vmatprep.subr.mxu0 0.0
    %458 = vmatpush1.msra.mxu0 0.0
    %459 = vmatprep.subr.mxu0 0.0
    %460 = vmatpush1.msra.mxu0 0.0
    %461 = vmatprep.subr.mxu0 0.0
    %462 = vmatpush1.msra.mxu0 0.0
    %463 = vmatprep.subr.mxu0 0.0
    %464 = vmatpush1.msra.mxu0 0.0
    %465 = vmatprep.subr.mxu0 0.0
    %466 = vmatpush1.msra.mxu0 0.0
    %467 = vmatprep.subr.mxu0 0.0
    %468 = vmatpush1.msra.mxu0 0.0
    %469 = vmatprep.subr.mxu0 0.0
    %470 = vmatpush1.msra.mxu0 0.0
    %471 = vmatprep.subr.mxu0 0.0
    %472 = vmatpush1.msra.mxu0 0.0
    %473 = vmatprep.subr.mxu0 0.0
    %474 = vmatpush1.msra.mxu0 0.0
    %475 = vmatprep.subr.mxu0 0.0
    %476 = vmatpush1.msra.mxu0 0.0
    %477 = vmatprep.mubr.f32.mxu0 0.0
    %478 = vmatmul.mubr.f32.gmra.mrb[0].mxu0 %v408
    %v479 = vpop.f32.mrb[0].mxu0
    %v480 = vadd.f32 %v404, %v479
    %v481 = vpop.f32.mrb[0].mxu0
    %482 = vdwg.mxu0
    %483 = vrot.lane.b32.xlu0 %v329, 124
    %v484 = vpop.permute.xlu0 %483
    %v485 = vsel %vm45, %v484, 0
    %487 = vmatprep.subr.mxu0 0.0
    %488 = vmatpush1.msra.mxu0 %v335
    %489 = vmatprep.subr.mxu0 0.0
    %490 = vmatpush1.msra.mxu0 0.0
    %491 = vmatprep.subr.mxu0 0.0
    %492 = vmatpush1.msra.mxu0 0.0
    %493 = vmatprep.subr.mxu0 0.0
    %494 = vmatpush1.msra.mxu0 0.0
    %495 = vmatprep.subr.mxu0 0.0
    %496 = vmatpush1.msra.mxu0 0.0
    %497 = vmatprep.subr.mxu0 0.0
    %498 = vmatpush1.msra.mxu0 0.0
    %499 = vmatprep.subr.mxu0 0.0
    %500 = vmatpush1.msra.mxu0 0.0
    %501 = vmatprep.subr.mxu0 0.0
    %502 = vmatpush1.msra.mxu0 0.0
    %503 = vmatprep.subr.mxu0 0.0
    %504 = vmatpush1.msra.mxu0 0.0
    %505 = vmatprep.subr.mxu0 0.0
    %506 = vmatpush1.msra.mxu0 0.0
    %507 = vmatprep.subr.mxu0 0.0
    %508 = vmatpush1.msra.mxu0 0.0
    %509 = vmatprep.subr.mxu0 0.0
    %510 = vmatpush1.msra.mxu0 0.0
    %511 = vmatprep.subr.mxu0 0.0
    %512 = vmatpush1.msra.mxu0 0.0
    %513 = vmatprep.subr.mxu0 0.0
    %514 = vmatpush1.msra.mxu0 0.0
    %515 = vmatprep.subr.mxu0 0.0
    %516 = vmatpush1.msra.mxu0 0.0
    %517 = vmatprep.subr.mxu0 0.0
    %518 = vmatpush1.msra.mxu0 0.0
    %519 = vmatprep.subr.mxu0 0.0
    %520 = vmatpush1.msra.mxu0 0.0
    %521 = vmatprep.subr.mxu0 0.0
    %522 = vmatpush1.msra.mxu0 0.0
    %523 = vmatprep.subr.mxu0 0.0
    %524 = vmatpush1.msra.mxu0 0.0
    %525 = vmatprep.subr.mxu0 0.0
    %526 = vmatpush1.msra.mxu0 0.0
    %527 = vmatprep.subr.mxu0 0.0
    %528 = vmatpush1.msra.mxu0 0.0
    %529 = vmatprep.subr.mxu0 0.0
    %530 = vmatpush1.msra.mxu0 0.0
    %531 = vmatprep.subr.mxu0 0.0
    %532 = vmatpush1.msra.mxu0 0.0
    %533 = vmatprep.subr.mxu0 0.0
    %534 = vmatpush1.msra.mxu0 0.0
    %535 = vmatprep.subr.mxu0 0.0
    %536 = vmatpush1.msra.mxu0 0.0
    %537 = vmatprep.subr.mxu0 0.0
    %538 = vmatpush1.msra.mxu0 0.0
    %539 = vmatprep.subr.mxu0 0.0
    %540 = vmatpush1.msra.mxu0 0.0
    %541 = vmatprep.subr.mxu0 0.0
    %542 = vmatpush1.msra.mxu0 0.0
    %543 = vmatprep.subr.mxu0 0.0
    %544 = vmatpush1.msra.mxu0 0.0
    %545 = vmatprep.subr.mxu0 0.0
    %546 = vmatpush1.msra.mxu0 0.0
    %547 = vmatprep.subr.mxu0 0.0
    %548 = vmatpush1.msra.mxu0 0.0
    %549 = vmatprep.subr.mxu0 0.0
    %550 = vmatpush1.msra.mxu0 0.0
    %551 = vmatprep.mubr.f32.mxu0 0.0
    %552 = vmatmul.mubr.f32.gmra.mrb[0].mxu0 %v485
    %v553 = vpop.f32.mrb[0].mxu0
    %v554 = vadd.f32 0.0, %v553
    %v555 = vpop.f32.mrb[0].mxu0
    %556 = vdwg.mxu0
    %v558 = vsel %vm323, %v480, 0
    %560 = vmatprep.subr.mxu0 0.0
    %561 = vmatpush1.msra.mxu0 %v326
    %562 = vmatprep.subr.mxu0 0.0
    %563 = vmatpush1.msra.mxu0 %v411
    %564 = vmatprep.subr.mxu0 0.0
    %565 = vmatpush1.msra.mxu0 0.0
    %566 = vmatprep.subr.mxu0 0.0
    %567 = vmatpush1.msra.mxu0 0.0
    %568 = vmatprep.subr.mxu0 0.0
    %569 = vmatpush1.msra.mxu0 0.0
    %570 = vmatprep.subr.mxu0 0.0
    %571 = vmatpush1.msra.mxu0 0.0
    %572 = vmatprep.subr.mxu0 0.0
    %573 = vmatpush1.msra.mxu0 0.0
    %574 = vmatprep.subr.mxu0 0.0
    %575 = vmatpush1.msra.mxu0 0.0
    %576 = vmatprep.subr.mxu0 0.0
    %577 = vmatpush1.msra.mxu0 0.0
    %578 = vmatprep.subr.mxu0 0.0
    %579 = vmatpush1.msra.mxu0 0.0
    %580 = vmatprep.subr.mxu0 0.0
    %581 = vmatpush1.msra.mxu0 0.0
    %582 = vmatprep.subr.mxu0 0.0
    %583 = vmatpush1.msra.mxu0 0.0
    %584 = vmatprep.subr.mxu0 0.0
    %585 = vmatpush1.msra.mxu0 0.0
    %586 = vmatprep.subr.mxu0 0.0
    %587 = vmatpush1.msra.mxu0 0.0
    %588 = vmatprep.subr.mxu0 0.0
    %589 = vmatpush1.msra.mxu0 0.0
    %590 = vmatprep.subr.mxu0 0.0
    %591 = vmatpush1.msra.mxu0 0.0
    %592 = vmatprep.subr.mxu0 0.0
    %593 = vmatpush1.msra.mxu0 0.0
    %594 = vmatprep.subr.mxu0 0.0
    %595 = vmatpush1.msra.mxu0 0.0
    %596 = vmatprep.subr.mxu0 0.0
    %597 = vmatpush1.msra.mxu0 0.0
    %598 = vmatprep.subr.mxu0 0.0
    %599 = vmatpush1.msra.mxu0 0.0
    %600 = vmatprep.subr.mxu0 0.0
    %601 = vmatpush1.msra.mxu0 0.0
    %602 = vmatprep.subr.mxu0 0.0
    %603 = vmatpush1.msra.mxu0 0.0
    %604 = vmatprep.subr.mxu0 0.0
    %605 = vmatpush1.msra.mxu0 0.0
    %606 = vmatprep.subr.mxu0 0.0
    %607 = vmatpush1.msra.mxu0 0.0
    %608 = vmatprep.subr.mxu0 0.0
    %609 = vmatpush1.msra.mxu0 0.0
    %610 = vmatprep.subr.mxu0 0.0
    %611 = vmatpush1.msra.mxu0 0.0
    %612 = vmatprep.subr.mxu0 0.0
    %613 = vmatpush1.msra.mxu0 0.0
    %614 = vmatprep.subr.mxu0 0.0
    %615 = vmatpush1.msra.mxu0 0.0
    %616 = vmatprep.subr.mxu0 0.0
    %617 = vmatpush1.msra.mxu0 0.0
    %618 = vmatprep.subr.mxu0 0.0
    %619 = vmatpush1.msra.mxu0 0.0
    %620 = vmatprep.subr.mxu0 0.0
    %621 = vmatpush1.msra.mxu0 0.0
    %622 = vmatprep.subr.mxu0 0.0
    %623 = vmatpush1.msra.mxu0 0.0
    %624 = vmatprep.mubr.f32.mxu0 0.0
    %625 = vmatmul.mubr.f32.gmra.mrb[0].mxu0 %v558
    %v626 = vpop.f32.mrb[0].mxu0
    %v627 = vadd.f32 %v554, %v626
    %v628 = vpop.f32.mrb[0].mxu0
    %629 = vdwg.mxu0
    %630 = vrot.lane.b32.xlu0 %v329, 120
    %v631 = vpop.permute.xlu0 %630
    %v632 = vsel %vm45, %v631, 0
    %634 = vmatprep.subr.mxu0 0.0
    %635 = vmatpush1.msra.mxu0 %v335
    %636 = vmatprep.subr.mxu0 0.0
    %637 = vmatpush1.msra.mxu0 0.0
    %638 = vmatprep.subr.mxu0 0.0
    %639 = vmatpush1.msra.mxu0 0.0
    %640 = vmatprep.subr.mxu0 0.0
    %641 = vmatpush1.msra.mxu0 0.0
    %642 = vmatprep.subr.mxu0 0.0
    %643 = vmatpush1.msra.mxu0 0.0
    %644 = vmatprep.subr.mxu0 0.0
    %645 = vmatpush1.msra.mxu0 0.0
    %646 = vmatprep.subr.mxu0 0.0
    %647 = vmatpush1.msra.mxu0 0.0
    %648 = vmatprep.subr.mxu0 0.0
    %649 = vmatpush1.msra.mxu0 0.0
    %650 = vmatprep.subr.mxu0 0.0
    %651 = vmatpush1.msra.mxu0 0.0
    %652 = vmatprep.subr.mxu0 0.0
    %653 = vmatpush1.msra.mxu0 0.0
    %654 = vmatprep.subr.mxu0 0.0
    %655 = vmatpush1.msra.mxu0 0.0
    %656 = vmatprep.subr.mxu0 0.0
    %657 = vmatpush1.msra.mxu0 0.0
    %658 = vmatprep.subr.mxu0 0.0
    %659 = vmatpush1.msra.mxu0 0.0
    %660 = vmatprep.subr.mxu0 0.0
    %661 = vmatpush1.msra.mxu0 0.0
    %662 = vmatprep.subr.mxu0 0.0
    %663 = vmatpush1.msra.mxu0 0.0
    %664 = vmatprep.subr.mxu0 0.0
    %665 = vmatpush1.msra.mxu0 0.0
    %666 = vmatprep.subr.mxu0 0.0
    %667 = vmatpush1.msra.mxu0 0.0
    %668 = vmatprep.subr.mxu0 0.0
    %669 = vmatpush1.msra.mxu0 0.0
    %670 = vmatprep.subr.mxu0 0.0
    %671 = vmatpush1.msra.mxu0 0.0
    %672 = vmatprep.subr.mxu0 0.0
    %673 = vmatpush1.msra.mxu0 0.0
    %674 = vmatprep.subr.mxu0 0.0
    %675 = vmatpush1.msra.mxu0 0.0
    %676 = vmatprep.subr.mxu0 0.0
    %677 = vmatpush1.msra.mxu0 0.0
    %678 = vmatprep.subr.mxu0 0.0
    %679 = vmatpush1.msra.mxu0 0.0
    %680 = vmatprep.subr.mxu0 0.0
    %681 = vmatpush1.msra.mxu0 0.0
    %682 = vmatprep.subr.mxu0 0.0
    %683 = vmatpush1.msra.mxu0 0.0
    %684 = vmatprep.subr.mxu0 0.0
    %685 = vmatpush1.msra.mxu0 0.0
    %686 = vmatprep.subr.mxu0 0.0
    %687 = vmatpush1.msra.mxu0 0.0
    %688 = vmatprep.subr.mxu0 0.0
    %689 = vmatpush1.msra.mxu0 0.0
    %690 = vmatprep.subr.mxu0 0.0
    %691 = vmatpush1.msra.mxu0 0.0
    %692 = vmatprep.subr.mxu0 0.0
    %693 = vmatpush1.msra.mxu0 0.0
    %694 = vmatprep.subr.mxu0 0.0
    %695 = vmatpush1.msra.mxu0 0.0
    %696 = vmatprep.subr.mxu0 0.0
    %697 = vmatpush1.msra.mxu0 0.0
    %698 = vmatprep.mubr.f32.mxu0 0.0
    %699 = vmatmul.mubr.f32.gmra.mrb[0].mxu0 %v632
    %v700 = vpop.f32.mrb[0].mxu0
    %v701 = vadd.f32 0.0, %v700
    %v702 = vpop.f32.mrb[0].mxu0
    %703 = vdwg.mxu0
    %v705 = vsel %vm323, %v627, 0
    %707 = vmatprep.subr.mxu0 0.0
    %708 = vmatpush1.msra.mxu0 %v326
    %709 = vmatprep.subr.mxu0 0.0
    %710 = vmatpush1.msra.mxu0 %v411
    %711 = vmatprep.subr.mxu0 0.0
    %712 = vmatpush1.msra.mxu0 0.0
    %713 = vmatprep.subr.mxu0 0.0
    %714 = vmatpush1.msra.mxu0 0.0
    %715 = vmatprep.subr.mxu0 0.0
    %716 = vmatpush1.msra.mxu0 0.0
    %717 = vmatprep.subr.mxu0 0.0
    %718 = vmatpush1.msra.mxu0 0.0
    %719 = vmatprep.subr.mxu0 0.0
    %720 = vmatpush1.msra.mxu0 0.0
    %721 = vmatprep.subr.mxu0 0.0
    %722 = vmatpush1.msra.mxu0 0.0
    %723 = vmatprep.subr.mxu0 0.0
    %724 = vmatpush1.msra.mxu0 0.0
    %725 = vmatprep.subr.mxu0 0.0
    %726 = vmatpush1.msra.mxu0 0.0
    %727 = vmatprep.subr.mxu0 0.0
    %728 = vmatpush1.msra.mxu0 0.0
    %729 = vmatprep.subr.mxu0 0.0
    %730 = vmatpush1.msra.mxu0 0.0
    %731 = vmatprep.subr.mxu0 0.0
    %732 = vmatpush1.msra.mxu0 0.0
    %733 = vmatprep.subr.mxu0 0.0
    %734 = vmatpush1.msra.mxu0 0.0
    %735 = vmatprep.subr.mxu0 0.0
    %736 = vmatpush1.msra.mxu0 0.0
    %737 = vmatprep.subr.mxu0 0.0
    %738 = vmatpush1.msra.mxu0 0.0
    %739 = vmatprep.subr.mxu0 0.0
    %740 = vmatpush1.msra.mxu0 0.0
    %741 = vmatprep.subr.mxu0 0.0
    %742 = vmatpush1.msra.mxu0 0.0
    %743 = vmatprep.subr.mxu0 0.0
    %744 = vmatpush1.msra.mxu0 0.0
    %745 = vmatprep.subr.mxu0 0.0
    %746 = vmatpush1.msra.mxu0 0.0
    %747 = vmatprep.subr.mxu0 0.0
    %748 = vmatpush1.msra.mxu0 0.0
    %749 = vmatprep.subr.mxu0 0.0
    %750 = vmatpush1.msra.mxu0 0.0
    %751 = vmatprep.subr.mxu0 0.0
    %752 = vmatpush1.msra.mxu0 0.0
    %753 = vmatprep.subr.mxu0 0.0
    %754 = vmatpush1.msra.mxu0 0.0
    %755 = vmatprep.subr.mxu0 0.0
    %756 = vmatpush1.msra.mxu0 0.0
    %757 = vmatprep.subr.mxu0 0.0
    %758 = vmatpush1.msra.mxu0 0.0
    %759 = vmatprep.subr.mxu0 0.0
    %760 = vmatpush1.msra.mxu0 0.0
    %761 = vmatprep.subr.mxu0 0.0
    %762 = vmatpush1.msra.mxu0 0.0
    %763 = vmatprep.subr.mxu0 0.0
    %764 = vmatpush1.msra.mxu0 0.0
    %765 = vmatprep.subr.mxu0 0.0
    %766 = vmatpush1.msra.mxu0 0.0
    %767 = vmatprep.subr.mxu0 0.0
    %768 = vmatpush1.msra.mxu0 0.0
    %769 = vmatprep.subr.mxu0 0.0
    %770 = vmatpush1.msra.mxu0 0.0
    %771 = vmatprep.mubr.f32.mxu0 0.0
    %772 = vmatmul.mubr.f32.gmra.mrb[0].mxu0 %v705
    %v773 = vpop.f32.mrb[0].mxu0
    %v774 = vadd.f32 %v701, %v773
    %v775 = vpop.f32.mrb[0].mxu0
    %776 = vdwg.mxu0
    %777 = vrot.lane.b32.xlu0 %v329, 116
    %v778 = vpop.permute.xlu0 %777
    %v779 = vsel %vm45, %v778, 0
    %781 = vmatprep.subr.mxu0 0.0
    %782 = vmatpush1.msra.mxu0 %v335
    %783 = vmatprep.subr.mxu0 0.0
    %784 = vmatpush1.msra.mxu0 0.0
    %785 = vmatprep.subr.mxu0 0.0
    %786 = vmatpush1.msra.mxu0 0.0
    %787 = vmatprep.subr.mxu0 0.0
    %788 = vmatpush1.msra.mxu0 0.0
    %789 = vmatprep.subr.mxu0 0.0
    %790 = vmatpush1.msra.mxu0 0.0
    %791 = vmatprep.subr.mxu0 0.0
    %792 = vmatpush1.msra.mxu0 0.0
    %793 = vmatprep.subr.mxu0 0.0
    %794 = vmatpush1.msra.mxu0 0.0
    %795 = vmatprep.subr.mxu0 0.0
    %796 = vmatpush1.msra.mxu0 0.0
    %797 = vmatprep.subr.mxu0 0.0
    %798 = vmatpush1.msra.mxu0 0.0
    %799 = vmatprep.subr.mxu0 0.0
    %800 = vmatpush1.msra.mxu0 0.0
    %801 = vmatprep.subr.mxu0 0.0
    %802 = vmatpush1.msra.mxu0 0.0
    %803 = vmatprep.subr.mxu0 0.0
    %804 = vmatpush1.msra.mxu0 0.0
    %805 = vmatprep.subr.mxu0 0.0
    %806 = vmatpush1.msra.mxu0 0.0
    %807 = vmatprep.subr.mxu0 0.0
    %808 = vmatpush1.msra.mxu0 0.0
    %809 = vmatprep.subr.mxu0 0.0
    %810 = vmatpush1.msra.mxu0 0.0
    %811 = vmatprep.subr.mxu0 0.0
    %812 = vmatpush1.msra.mxu0 0.0
    %813 = vmatprep.subr.mxu0 0.0
    %814 = vmatpush1.msra.mxu0 0.0
    %815 = vmatprep.subr.mxu0 0.0
    %816 = vmatpush1.msra.mxu0 0.0
    %817 = vmatprep.subr.mxu0 0.0
    %818 = vmatpush1.msra.mxu0 0.0
    %819 = vmatprep.subr.mxu0 0.0
    %820 = vmatpush1.msra.mxu0 0.0
    %821 = vmatprep.subr.mxu0 0.0
    %822 = vmatpush1.msra.mxu0 0.0
    %823 = vmatprep.subr.mxu0 0.0
    %824 = vmatpush1.msra.mxu0 0.0
    %825 = vmatprep.subr.mxu0 0.0
    %826 = vmatpush1.msra.mxu0 0.0
    %827 = vmatprep.subr.mxu0 0.0
    %828 = vmatpush1.msra.mxu0 0.0
    %829 = vmatprep.subr.mxu0 0.0
    %830 = vmatpush1.msra.mxu0 0.0
    %831 = vmatprep.subr.mxu0 0.0
    %832 = vmatpush1.msra.mxu0 0.0
    %833 = vmatprep.subr.mxu0 0.0
    %834 = vmatpush1.msra.mxu0 0.0
    %835 = vmatprep.subr.mxu0 0.0
    %836 = vmatpush1.msra.mxu0 0.0
    %837 = vmatprep.subr.mxu0 0.0
    %838 = vmatpush1.msra.mxu0 0.0
    %839 = vmatprep.subr.mxu0 0.0
    %840 = vmatpush1.msra.mxu0 0.0
    %841 = vmatprep.subr.mxu0 0.0
    %842 = vmatpush1.msra.mxu0 0.0
    %843 = vmatprep.subr.mxu0 0.0
    %844 = vmatpush1.msra.mxu0 0.0
    %845 = vmatprep.mubr.f32.mxu0 0.0
    %846 = vmatmul.mubr.f32.gmra.mrb[0].mxu0 %v779
    %v847 = vpop.f32.mrb[0].mxu0
    %v848 = vadd.f32 0.0, %v847
    %v849 = vpop.f32.mrb[0].mxu0
    %850 = vdwg.mxu0
    %v852 = vsel %vm323, %v774, 0
    %854 = vmatprep.subr.mxu0 0.0
    %855 = vmatpush1.msra.mxu0 %v326
    %856 = vmatprep.subr.mxu0 0.0
    %857 = vmatpush1.msra.mxu0 %v411
    %858 = vmatprep.subr.mxu0 0.0
    %859 = vmatpush1.msra.mxu0 0.0
    %860 = vmatprep.subr.mxu0 0.0
    %861 = vmatpush1.msra.mxu0 0.0
    %862 = vmatprep.subr.mxu0 0.0
    %863 = vmatpush1.msra.mxu0 0.0
    %864 = vmatprep.subr.mxu0 0.0
    %865 = vmatpush1.msra.mxu0 0.0
    %866 = vmatprep.subr.mxu0 0.0
    %867 = vmatpush1.msra.mxu0 0.0
    %868 = vmatprep.subr.mxu0 0.0
    %869 = vmatpush1.msra.mxu0 0.0
    %870 = vmatprep.subr.mxu0 0.0
    %871 = vmatpush1.msra.mxu0 0.0
    %872 = vmatprep.subr.mxu0 0.0
    %873 = vmatpush1.msra.mxu0 0.0
    %874 = vmatprep.subr.mxu0 0.0
    %875 = vmatpush1.msra.mxu0 0.0
    %876 = vmatprep.subr.mxu0 0.0
    %877 = vmatpush1.msra.mxu0 0.0
    %878 = vmatprep.subr.mxu0 0.0
    %879 = vmatpush1.msra.mxu0 0.0
    %880 = vmatprep.subr.mxu0 0.0
    %881 = vmatpush1.msra.mxu0 0.0
    %882 = vmatprep.subr.mxu0 0.0
    %883 = vmatpush1.msra.mxu0 0.0
    %884 = vmatprep.subr.mxu0 0.0
    %885 = vmatpush1.msra.mxu0 0.0
    %886 = vmatprep.subr.mxu0 0.0
    %887 = vmatpush1.msra.mxu0 0.0
    %888 = vmatprep.subr.mxu0 0.0
    %889 = vmatpush1.msra.mxu0 0.0
    %890 = vmatprep.subr.mxu0 0.0
    %891 = vmatpush1.msra.mxu0 0.0
    %892 = vmatprep.subr.mxu0 0.0
    %893 = vmatpush1.msra.mxu0 0.0
    %894 = vmatprep.subr.mxu0 0.0
    %895 = vmatpush1.msra.mxu0 0.0
    %896 = vmatprep.subr.mxu0 0.0
    %897 = vmatpush1.msra.mxu0 0.0
    %898 = vmatprep.subr.mxu0 0.0
    %899 = vmatpush1.msra.mxu0 0.0
    %900 = vmatprep.subr.mxu0 0.0
    %901 = vmatpush1.msra.mxu0 0.0
    %902 = vmatprep.subr.mxu0 0.0
    %903 = vmatpush1.msra.mxu0 0.0
    %904 = vmatprep.subr.mxu0 0.0
    %905 = vmatpush1.msra.mxu0 0.0
    %906 = vmatprep.subr.mxu0 0.0
    %907 = vmatpush1.msra.mxu0 0.0
    %908 = vmatprep.subr.mxu0 0.0
    %909 = vmatpush1.msra.mxu0 0.0
    %910 = vmatprep.subr.mxu0 0.0
    %911 = vmatpush1.msra.mxu0 0.0
    %912 = vmatprep.subr.mxu0 0.0
    %913 = vmatpush1.msra.mxu0 0.0
    %914 = vmatprep.subr.mxu0 0.0
    %915 = vmatpush1.msra.mxu0 0.0
    %916 = vmatprep.subr.mxu0 0.0
    %917 = vmatpush1.msra.mxu0 0.0
    %918 = vmatprep.mubr.f32.mxu0 0.0
    %919 = vmatmul.mubr.f32.gmra.mrb[0].mxu0 %v852
    %v920 = vpop.f32.mrb[0].mxu0
    %v921 = vadd.f32 %v848, %v920
    %v922 = vpop.f32.mrb[0].mxu0
    %923 = vdwg.mxu0
    %924 = vrot.lane.b32.xlu0 %v329, 112
    %v925 = vpop.permute.xlu0 %924
    %v926 = vsel %vm45, %v925, 0
    %928 = vmatprep.subr.mxu0 0.0
    %929 = vmatpush1.msra.mxu0 %v335
    %930 = vmatprep.subr.mxu0 0.0
    %931 = vmatpush1.msra.mxu0 0.0
    %932 = vmatprep.subr.mxu0 0.0
    %933 = vmatpush1.msra.mxu0 0.0
    %934 = vmatprep.subr.mxu0 0.0
    %935 = vmatpush1.msra.mxu0 0.0
    %936 = vmatprep.subr.mxu0 0.0
    %937 = vmatpush1.msra.mxu0 0.0
    %938 = vmatprep.subr.mxu0 0.0
    %939 = vmatpush1.msra.mxu0 0.0
    %940 = vmatprep.subr.mxu0 0.0
    %941 = vmatpush1.msra.mxu0 0.0
    %942 = vmatprep.subr.mxu0 0.0
    %943 = vmatpush1.msra.mxu0 0.0
    %944 = vmatprep.subr.mxu0 0.0
    %945 = vmatpush1.msra.mxu0 0.0
    %946 = vmatprep.subr.mxu0 0.0
    %947 = vmatpush1.msra.mxu0 0.0
    %948 = vmatprep.subr.mxu0 0.0
    %949 = vmatpush1.msra.mxu0 0.0
    %950 = vmatprep.subr.mxu0 0.0
    %951 = vmatpush1.msra.mxu0 0.0
    %952 = vmatprep.subr.mxu0 0.0
    %953 = vmatpush1.msra.mxu0 0.0
    %954 = vmatprep.subr.mxu0 0.0
    %955 = vmatpush1.msra.mxu0 0.0
    %956 = vmatprep.subr.mxu0 0.0
    %957 = vmatpush1.msra.mxu0 0.0
    %958 = vmatprep.subr.mxu0 0.0
    %959 = vmatpush1.msra.mxu0 0.0
    %960 = vmatprep.subr.mxu0 0.0
    %961 = vmatpush1.msra.mxu0 0.0
    %962 = vmatprep.subr.mxu0 0.0
    %963 = vmatpush1.msra.mxu0 0.0
    %964 = vmatprep.subr.mxu0 0.0
    %965 = vmatpush1.msra.mxu0 0.0
    %966 = vmatprep.subr.mxu0 0.0
    %967 = vmatpush1.msra.mxu0 0.0
    %968 = vmatprep.subr.mxu0 0.0
    %969 = vmatpush1.msra.mxu0 0.0
    %970 = vmatprep.subr.mxu0 0.0
    %971 = vmatpush1.msra.mxu0 0.0
    %972 = vmatprep.subr.mxu0 0.0
    %973 = vmatpush1.msra.mxu0 0.0
    %974 = vmatprep.subr.mxu0 0.0
    %975 = vmatpush1.msra.mxu0 0.0
    %976 = vmatprep.subr.mxu0 0.0
    %977 = vmatpush1.msra.mxu0 0.0
    %978 = vmatprep.subr.mxu0 0.0
    %979 = vmatpush1.msra.mxu0 0.0
    %980 = vmatprep.subr.mxu0 0.0
    %981 = vmatpush1.msra.mxu0 0.0
    %982 = vmatprep.subr.mxu0 0.0
    %983 = vmatpush1.msra.mxu0 0.0
    %984 = vmatprep.subr.mxu0 0.0
    %985 = vmatpush1.msra.mxu0 0.0
    %986 = vmatprep.subr.mxu0 0.0
    %987 = vmatpush1.msra.mxu0 0.0
    %988 = vmatprep.subr.mxu0 0.0
    %989 = vmatpush1.msra.mxu0 0.0
    %990 = vmatprep.subr.mxu0 0.0
    %991 = vmatpush1.msra.mxu0 0.0
    %992 = vmatprep.mubr.f32.mxu0 0.0
    %993 = vmatmul.mubr.f32.gmra.mrb[0].mxu0 %v926
    %v994 = vpop.f32.mrb[0].mxu0
    %v995 = vadd.f32 0.0, %v994
    %v996 = vpop.f32.mrb[0].mxu0
    %997 = vdwg.mxu0
    %v999 = vsel %vm323, %v921, 0
    %1001 = vmatprep.subr.mxu0 0.0
    %1002 = vmatpush1.msra.mxu0 %v326
    %1003 = vmatprep.subr.mxu0 0.0
    %1004 = vmatpush1.msra.mxu0 %v411
    %1005 = vmatprep.subr.mxu0 0.0
    %1006 = vmatpush1.msra.mxu0 0.0
    %1007 = vmatprep.subr.mxu0 0.0
    %1008 = vmatpush1.msra.mxu0 0.0
    %1009 = vmatprep.subr.mxu0 0.0
    %1010 = vmatpush1.msra.mxu0 0.0
    %1011 = vmatprep.subr.mxu0 0.0
    %1012 = vmatpush1.msra.mxu0 0.0
    %1013 = vmatprep.subr.mxu0 0.0
    %1014 = vmatpush1.msra.mxu0 0.0
    %1015 = vmatprep.subr.mxu0 0.0
    %1016 = vmatpush1.msra.mxu0 0.0
    %1017 = vmatprep.subr.mxu0 0.0
    %1018 = vmatpush1.msra.mxu0 0.0
    %1019 = vmatprep.subr.mxu0 0.0
    %1020 = vmatpush1.msra.mxu0 0.0
    %1021 = vmatprep.subr.mxu0 0.0
    %1022 = vmatpush1.msra.mxu0 0.0
    %1023 = vmatprep.subr.mxu0 0.0
    %1024 = vmatpush1.msra.mxu0 0.0
    %1025 = vmatprep.subr.mxu0 0.0
    %1026 = vmatpush1.msra.mxu0 0.0
    %1027 = vmatprep.subr.mxu0 0.0
    %1028 = vmatpush1.msra.mxu0 0.0
    %1029 = vmatprep.subr.mxu0 0.0
    %1030 = vmatpush1.msra.mxu0 0.0
    %1031 = vmatprep.subr.mxu0 0.0
    %1032 = vmatpush1.msra.mxu0 0.0
    %1033 = vmatprep.subr.mxu0 0.0
    %1034 = vmatpush1.msra.mxu0 0.0
    %1035 = vmatprep.subr.mxu0 0.0
    %1036 = vmatpush1.msra.mxu0 0.0
    %1037 = vmatprep.subr.mxu0 0.0
    %1038 = vmatpush1.msra.mxu0 0.0
    %1039 = vmatprep.subr.mxu0 0.0
    %1040 = vmatpush1.msra.mxu0 0.0
    %1041 = vmatprep.subr.mxu0 0.0
    %1042 = vmatpush1.msra.mxu0 0.0
    %1043 = vmatprep.subr.mxu0 0.0
    %1044 = vmatpush1.msra.mxu0 0.0
    %1045 = vmatprep.subr.mxu0 0.0
    %1046 = vmatpush1.msra.mxu0 0.0
    %1047 = vmatprep.subr.mxu0 0.0
    %1048 = vmatpush1.msra.mxu0 0.0
    %1049 = vmatprep.subr.mxu0 0.0
    %1050 = vmatpush1.msra.mxu0 0.0
    %1051 = vmatprep.subr.mxu0 0.0
    %1052 = vmatpush1.msra.mxu0 0.0
    %1053 = vmatprep.subr.mxu0 0.0
    %1054 = vmatpush1.msra.mxu0 0.0
    %1055 = vmatprep.subr.mxu0 0.0
    %1056 = vmatpush1.msra.mxu0 0.0
    %1057 = vmatprep.subr.mxu0 0.0
    %1058 = vmatpush1.msra.mxu0 0.0
    %1059 = vmatprep.subr.mxu0 0.0
    %1060 = vmatpush1.msra.mxu0 0.0
    %1061 = vmatprep.subr.mxu0 0.0
    %1062 = vmatpush1.msra.mxu0 0.0
    %1063 = vmatprep.subr.mxu0 0.0
    %1064 = vmatpush1.msra.mxu0 0.0
    %1065 = vmatprep.mubr.f32.mxu0 0.0
    %1066 = vmatmul.mubr.f32.gmra.mrb[0].mxu0 %v999
    %v1067 = vpop.f32.mrb[0].mxu0
    %v1068 = vadd.f32 %v995, %v1067
    %v1069 = vpop.f32.mrb[0].mxu0
    %1070 = vdwg.mxu0
    %1071 = vrot.lane.b32.xlu0 %v329, 108
    %v1072 = vpop.permute.xlu0 %1071
    %v1073 = vsel %vm45, %v1072, 0
    %1075 = vmatprep.subr.mxu0 0.0
    %1076 = vmatpush1.msra.mxu0 %v335
    %1077 = vmatprep.subr.mxu0 0.0
    %1078 = vmatpush1.msra.mxu0 0.0
    %1079 = vmatprep.subr.mxu0 0.0
    %1080 = vmatpush1.msra.mxu0 0.0
    %1081 = vmatprep.subr.mxu0 0.0
    %1082 = vmatpush1.msra.mxu0 0.0
    %1083 = vmatprep.subr.mxu0 0.0
    %1084 = vmatpush1.msra.mxu0 0.0
    %1085 = vmatprep.subr.mxu0 0.0
    %1086 = vmatpush1.msra.mxu0 0.0
    %1087 = vmatprep.subr.mxu0 0.0
    %1088 = vmatpush1.msra.mxu0 0.0
    %1089 = vmatprep.subr.mxu0 0.0
    %1090 = vmatpush1.msra.mxu0 0.0
    %1091 = vmatprep.subr.mxu0 0.0
    %1092 = vmatpush1.msra.mxu0 0.0
    %1093 = vmatprep.subr.mxu0 0.0
    %1094 = vmatpush1.msra.mxu0 0.0
    %1095 = vmatprep.subr.mxu0 0.0
    %1096 = vmatpush1.msra.mxu0 0.0
    %1097 = vmatprep.subr.mxu0 0.0
    %1098 = vmatpush1.msra.mxu0 0.0
    %1099 = vmatprep.subr.mxu0 0.0
    %1100 = vmatpush1.msra.mxu0 0.0
    %1101 = vmatprep.subr.mxu0 0.0
    %1102 = vmatpush1.msra.mxu0 0.0
    %1103 = vmatprep.subr.mxu0 0.0
    %1104 = vmatpush1.msra.mxu0 0.0
    %1105 = vmatprep.subr.mxu0 0.0
    %1106 = vmatpush1.msra.mxu0 0.0
    %1107 = vmatprep.subr.mxu0 0.0
    %1108 = vmatpush1.msra.mxu0 0.0
    %1109 = vmatprep.subr.mxu0 0.0
    %1110 = vmatpush1.msra.mxu0 0.0
    %1111 = vmatprep.subr.mxu0 0.0
    %1112 = vmatpush1.msra.mxu0 0.0
    %1113 = vmatprep.subr.mxu0 0.0
    %1114 = vmatpush1.msra.mxu0 0.0
    %1115 = vmatprep.subr.mxu0 0.0
    %1116 = vmatpush1.msra.mxu0 0.0
    %1117 = vmatprep.subr.mxu0 0.0
    %1118 = vmatpush1.msra.mxu0 0.0
    %1119 = vmatprep.subr.mxu0 0.0
    %1120 = vmatpush1.msra.mxu0 0.0
    %1121 = vmatprep.subr.mxu0 0.0
    %1122 = vmatpush1.msra.mxu0 0.0
    %1123 = vmatprep.subr.mxu0 0.0
    %1124 = vmatpush1.msra.mxu0 0.0
    %1125 = vmatprep.subr.mxu0 0.0
    %1126 = vmatpush1.msra.mxu0 0.0
    %1127 = vmatprep.subr.mxu0 0.0
    %1128 = vmatpush1.msra.mxu0 0.0
    %1129 = vmatprep.subr.mxu0 0.0
    %1130 = vmatpush1.msra.mxu0 0.0
    %1131 = vmatprep.subr.mxu0 0.0
    %1132 = vmatpush1.msra.mxu0 0.0
    %1133 = vmatprep.subr.mxu0 0.0
    %1134 = vmatpush1.msra.mxu0 0.0
    %1135 = vmatprep.subr.mxu0 0.0
    %1136 = vmatpush1.msra.mxu0 0.0
    %1137 = vmatprep.subr.mxu0 0.0
    %1138 = vmatpush1.msra.mxu0 0.0
    %1139 = vmatprep.mubr.f32.mxu0 0.0
    %1140 = vmatmul.mubr.f32.gmra.mrb[0].mxu0 %v1073
    %v1141 = vpop.f32.mrb[0].mxu0
    %v1142 = vadd.f32 0.0, %v1141
    %v1143 = vpop.f32.mrb[0].mxu0
    %1144 = vdwg.mxu0
    %v1146 = vsel %vm323, %v1068, 0
    %1148 = vmatprep.subr.mxu0 0.0
    %1149 = vmatpush1.msra.mxu0 %v326
    %1150 = vmatprep.subr.mxu0 0.0
    %1151 = vmatpush1.msra.mxu0 %v411
    %1152 = vmatprep.subr.mxu0 0.0
    %1153 = vmatpush1.msra.mxu0 0.0
    %1154 = vmatprep.subr.mxu0 0.0
    %1155 = vmatpush1.msra.mxu0 0.0
    %1156 = vmatprep.subr.mxu0 0.0
    %1157 = vmatpush1.msra.mxu0 0.0
    %1158 = vmatprep.subr.mxu0 0.0
    %1159 = vmatpush1.msra.mxu0 0.0
    %1160 = vmatprep.subr.mxu0 0.0
    %1161 = vmatpush1.msra.mxu0 0.0
    %1162 = vmatprep.subr.mxu0 0.0
    %1163 = vmatpush1.msra.mxu0 0.0
    %1164 = vmatprep.subr.mxu0 0.0
    %1165 = vmatpush1.msra.mxu0 0.0
    %1166 = vmatprep.subr.mxu0 0.0
    %1167 = vmatpush1.msra.mxu0 0.0
    %1168 = vmatprep.subr.mxu0 0.0
    %1169 = vmatpush1.msra.mxu0 0.0
    %1170 = vmatprep.subr.mxu0 0.0
    %1171 = vmatpush1.msra.mxu0 0.0
    %1172 = vmatprep.subr.mxu0 0.0
    %1173 = vmatpush1.msra.mxu0 0.0
    %1174 = vmatprep.subr.mxu0 0.0
    %1175 = vmatpush1.msra.mxu0 0.0
    %1176 = vmatprep.subr.mxu0 0.0
    %1177 = vmatpush1.msra.mxu0 0.0
    %1178 = vmatprep.subr.mxu0 0.0
    %1179 = vmatpush1.msra.mxu0 0.0
    %1180 = vmatprep.subr.mxu0 0.0
    %1181 = vmatpush1.msra.mxu0 0.0
    %1182 = vmatprep.subr.mxu0 0.0
    %1183 = vmatpush1.msra.mxu0 0.0
    %1184 = vmatprep.subr.mxu0 0.0
    %1185 = vmatpush1.msra.mxu0 0.0
    %1186 = vmatprep.subr.mxu0 0.0
    %1187 = vmatpush1.msra.mxu0 0.0
    %1188 = vmatprep.subr.mxu0 0.0
    %1189 = vmatpush1.msra.mxu0 0.0
    %1190 = vmatprep.subr.mxu0 0.0
    %1191 = vmatpush1.msra.mxu0 0.0
    %1192 = vmatprep.subr.mxu0 0.0
    %1193 = vmatpush1.msra.mxu0 0.0
    %1194 = vmatprep.subr.mxu0 0.0
    %1195 = vmatpush1.msra.mxu0 0.0
    %1196 = vmatprep.subr.mxu0 0.0
    %1197 = vmatpush1.msra.mxu0 0.0
    %1198 = vmatprep.subr.mxu0 0.0
    %1199 = vmatpush1.msra.mxu0 0.0
    %1200 = vmatprep.subr.mxu0 0.0
    %1201 = vmatpush1.msra.mxu0 0.0
    %1202 = vmatprep.subr.mxu0 0.0
    %1203 = vmatpush1.msra.mxu0 0.0
    %1204 = vmatprep.subr.mxu0 0.0
    %1205 = vmatpush1.msra.mxu0 0.0
    %1206 = vmatprep.subr.mxu0 0.0
    %1207 = vmatpush1.msra.mxu0 0.0
    %1208 = vmatprep.subr.mxu0 0.0
    %1209 = vmatpush1.msra.mxu0 0.0
    %1210 = vmatprep.subr.mxu0 0.0
    %1211 = vmatpush1.msra.mxu0 0.0
    %1212 = vmatprep.mubr.f32.mxu0 0.0
    %1213 = vmatmul.mubr.f32.gmra.mrb[0].mxu0 %v1146
    %v1214 = vpop.f32.mrb[0].mxu0
    %v1215 = vadd.f32 %v1142, %v1214
    %v1216 = vpop.f32.mrb[0].mxu0
    %1217 = vdwg.mxu0
    %1218 = vrot.lane.b32.xlu0 %v329, 104
    %v1219 = vpop.permute.xlu0 %1218
    %v1220 = vsel %vm45, %v1219, 0
    %1222 = vmatprep.subr.mxu0 0.0
    %1223 = vmatpush1.msra.mxu0 %v335
    %1224 = vmatprep.subr.mxu0 0.0
    %1225 = vmatpush1.msra.mxu0 0.0
    %1226 = vmatprep.subr.mxu0 0.0
    %1227 = vmatpush1.msra.mxu0 0.0
    %1228 = vmatprep.subr.mxu0 0.0
    %1229 = vmatpush1.msra.mxu0 0.0
    %1230 = vmatprep.subr.mxu0 0.0
    %1231 = vmatpush1.msra.mxu0 0.0
    %1232 = vmatprep.subr.mxu0 0.0
    %1233 = vmatpush1.msra.mxu0 0.0
    %1234 = vmatprep.subr.mxu0 0.0
    %1235 = vmatpush1.msra.mxu0 0.0
    %1236 = vmatprep.subr.mxu0 0.0
    %1237 = vmatpush1.msra.mxu0 0.0
    %1238 = vmatprep.subr.mxu0 0.0
    %1239 = vmatpush1.msra.mxu0 0.0
    %1240 = vmatprep.subr.mxu0 0.0
    %1241 = vmatpush1.msra.mxu0 0.0
    %1242 = vmatprep.subr.mxu0 0.0
    %1243 = vmatpush1.msra.mxu0 0.0
    %1244 = vmatprep.subr.mxu0 0.0
    %1245 = vmatpush1.msra.mxu0 0.0
    %1246 = vmatprep.subr.mxu0 0.0
    %1247 = vmatpush1.msra.mxu0 0.0
    %1248 = vmatprep.subr.mxu0 0.0
    %1249 = vmatpush1.msra.mxu0 0.0
    %1250 = vmatprep.subr.mxu0 0.0
    %1251 = vmatpush1.msra.mxu0 0.0
    %1252 = vmatprep.subr.mxu0 0.0
    %1253 = vmatpush1.msra.mxu0 0.0
    %1254 = vmatprep.subr.mxu0 0.0
    %1255 = vmatpush1.msra.mxu0 0.0
    %1256 = vmatprep.subr.mxu0 0.0
    %1257 = vmatpush1.msra.mxu0 0.0
    %1258 = vmatprep.subr.mxu0 0.0
    %1259 = vmatpush1.msra.mxu0 0.0
    %1260 = vmatprep.subr.mxu0 0.0
    %1261 = vmatpush1.msra.mxu0 0.0
    %1262 = vmatprep.subr.mxu0 0.0
    %1263 = vmatpush1.msra.mxu0 0.0
    %1264 = vmatprep.subr.mxu0 0.0
    %1265 = vmatpush1.msra.mxu0 0.0
    %1266 = vmatprep.subr.mxu0 0.0
    %1267 = vmatpush1.msra.mxu0 0.0
    %1268 = vmatprep.subr.mxu0 0.0
    %1269 = vmatpush1.msra.mxu0 0.0
    %1270 = vmatprep.subr.mxu0 0.0
    %1271 = vmatpush1.msra.mxu0 0.0
    %1272 = vmatprep.subr.mxu0 0.0
    %1273 = vmatpush1.msra.mxu0 0.0
    %1274 = vmatprep.subr.mxu0 0.0
    %1275 = vmatpush1.msra.mxu0 0.0
    %1276 = vmatprep.subr.mxu0 0.0
    %1277 = vmatpush1.msra.mxu0 0.0
    %1278 = vmatprep.subr.mxu0 0.0
    %1279 = vmatpush1.msra.mxu0 0.0
    %1280 = vmatprep.subr.mxu0 0.0
    %1281 = vmatpush1.msra.mxu0 0.0
    %1282 = vmatprep.subr.mxu0 0.0
    %1283 = vmatpush1.msra.mxu0 0.0
    %1284 = vmatprep.subr.mxu0 0.0
    %1285 = vmatpush1.msra.mxu0 0.0
    %1286 = vmatprep.mubr.f32.mxu0 0.0
    %1287 = vmatmul.mubr.f32.gmra.mrb[0].mxu0 %v1220
    %v1288 = vpop.f32.mrb[0].mxu0
    %v1289 = vadd.f32 0.0, %v1288
    %v1290 = vpop.f32.mrb[0].mxu0
    %1291 = vdwg.mxu0
    %v1293 = vsel %vm323, %v1215, 0
    %1295 = vmatprep.subr.mxu0 0.0
    %1296 = vmatpush1.msra.mxu0 %v326
    %1297 = vmatprep.subr.mxu0 0.0
    %1298 = vmatpush1.msra.mxu0 %v411
    %1299 = vmatprep.subr.mxu0 0.0
    %1300 = vmatpush1.msra.mxu0 0.0
    %1301 = vmatprep.subr.mxu0 0.0
    %1302 = vmatpush1.msra.mxu0 0.0
    %1303 = vmatprep.subr.mxu0 0.0
    %1304 = vmatpush1.msra.mxu0 0.0
    %1305 = vmatprep.subr.mxu0 0.0
    %1306 = vmatpush1.msra.mxu0 0.0
    %1307 = vmatprep.subr.mxu0 0.0
    %1308 = vmatpush1.msra.mxu0 0.0
    %1309 = vmatprep.subr.mxu0 0.0
    %1310 = vmatpush1.msra.mxu0 0.0
    %1311 = vmatprep.subr.mxu0 0.0
    %1312 = vmatpush1.msra.mxu0 0.0
    %1313 = vmatprep.subr.mxu0 0.0
    %1314 = vmatpush1.msra.mxu0 0.0
    %1315 = vmatprep.subr.mxu0 0.0
    %1316 = vmatpush1.msra.mxu0 0.0
    %1317 = vmatprep.subr.mxu0 0.0
    %1318 = vmatpush1.msra.mxu0 0.0
    %1319 = vmatprep.subr.mxu0 0.0
    %1320 = vmatpush1.msra.mxu0 0.0
    %1321 = vmatprep.subr.mxu0 0.0
    %1322 = vmatpush1.msra.mxu0 0.0
    %1323 = vmatprep.subr.mxu0 0.0
    %1324 = vmatpush1.msra.mxu0 0.0
    %1325 = vmatprep.subr.mxu0 0.0
    %1326 = vmatpush1.msra.mxu0 0.0
    %1327 = vmatprep.subr.mxu0 0.0
    %1328 = vmatpush1.msra.mxu0 0.0
    %1329 = vmatprep.subr.mxu0 0.0
    %1330 = vmatpush1.msra.mxu0 0.0
    %1331 = vmatprep.subr.mxu0 0.0
    %1332 = vmatpush1.msra.mxu0 0.0
    %1333 = vmatprep.subr.mxu0 0.0
    %1334 = vmatpush1.msra.mxu0 0.0
    %1335 = vmatprep.subr.mxu0 0.0
    %1336 = vmatpush1.msra.mxu0 0.0
    %1337 = vmatprep.subr.mxu0 0.0
    %1338 = vmatpush1.msra.mxu0 0.0
    %1339 = vmatprep.subr.mxu0 0.0
    %1340 = vmatpush1.msra.mxu0 0.0
    %1341 = vmatprep.subr.mxu0 0.0
    %1342 = vmatpush1.msra.mxu0 0.0
    %1343 = vmatprep.subr.mxu0 0.0
    %1344 = vmatpush1.msra.mxu0 0.0
    %1345 = vmatprep.subr.mxu0 0.0
    %1346 = vmatpush1.msra.mxu0 0.0
    %1347 = vmatprep.subr.mxu0 0.0
    %1348 = vmatpush1.msra.mxu0 0.0
    %1349 = vmatprep.subr.mxu0 0.0
    %1350 = vmatpush1.msra.mxu0 0.0
    %1351 = vmatprep.subr.mxu0 0.0
    %1352 = vmatpush1.msra.mxu0 0.0
    %1353 = vmatprep.subr.mxu0 0.0
    %1354 = vmatpush1.msra.mxu0 0.0
    %1355 = vmatprep.subr.mxu0 0.0
    %1356 = vmatpush1.msra.mxu0 0.0
    %1357 = vmatprep.subr.mxu0 0.0
    %1358 = vmatpush1.msra.mxu0 0.0
    %1359 = vmatprep.mubr.f32.mxu0 0.0
    %1360 = vmatmul.mubr.f32.gmra.mrb[0].mxu0 %v1293
    %v1361 = vpop.f32.mrb[0].mxu0
    %v1362 = vadd.f32 %v1289, %v1361
    %v1363 = vpop.f32.mrb[0].mxu0
    %1364 = vdwg.mxu0
    %1365 = vrot.lane.b32.xlu0 %v480, 12
    %v1366 = vpop.permute.xlu0 %1365
    %1368 = vrot.lane.b32.xlu0 %v627, 24
    %v1369 = vpop.permute.xlu0 %1368
    %1371 = vrot.lane.b32.xlu0 %v774, 36
    %v1372 = vpop.permute.xlu0 %1371
    %1374 = vrot.lane.b32.xlu0 %v921, 48
    %v1375 = vpop.permute.xlu0 %1374
    %1377 = vrot.lane.b32.xlu0 %v1068, 60
    %v1378 = vpop.permute.xlu0 %1377
    %1380 = vrot.lane.b32.xlu0 %v1215, 72
    %v1381 = vpop.permute.xlu0 %1380
    %1384 = vrot.lane.b32.xlu0 %v1362, 84
    %v1385 = vpop.permute.xlu0 %1384
    %v1387 = vsel %vm323, %v330, %v1366
    %vm1388 = vcmask 195584
    %v1389 = vsel %vm1388, %v1387, %v1369
    %vm1390 = vcmask 293888
    %v1391 = vsel %vm1390, %v1389, %v1372
    %vm1392 = vcmask 392192
    %v1393 = vsel %vm1392, %v1391, %v1375
    %vm1394 = vcmask 490496
    %v1395 = vsel %vm1394, %v1393, %v1378
    %vm1396 = vcmask 588800
    %v1397 = vsel %vm1396, %v1395, %v1381
    %vm1398 = vcmask 687104
    %v1399 = vsel %vm1398, %v1397, %v1385
    %vm1400 = vcmask 779264
    %1401 = vst.msk [vmem:[%s10] sm:$0x3] %vm1400, %v1399
    // Predicated region
    $region38: #{deina_forward.1} parent=1 // pred_check
      _
    $region39: #{deina_forward.1} parent=1 // pred_check_branch
      %1403 = sbr.rel (0) target = $region41
    $region40: #{deina_forward.1} parent=1 // pred_region
      %s1405 = ssub.s32 256, 256
      %1406 = vsyncadd [#allocation3], %s1405
      %s1407 = sshll.u32 [#allocation2], 4
      %s1408 = int_to_ptr.vmem [resolvable:$true] %s1407
      %1413 = dma.vmem_to_hbm [thread:$0]  %s1408, 256, %s9, [#allocation3], 128, 128, 8
    $region41: #{deina_forward.1} parent=1 // pred_fallthru
      _
    // Predicated region
    $region42: #{deina_forward.1} parent=1 // pred_check
      _
    $region43: #{deina_forward.1} parent=1 // pred_check_branch
      %1415 = sbr.rel (0) target = $region45
    $region44: #{deina_forward.1} parent=1 // pred_region
      _
    $region45: #{deina_forward.1} parent=1 // pred_fallthru
      _
    // Predicated region
    $region46: #{deina_forward.1} parent=1 // pred_check
      _
    $region47: #{deina_forward.1} parent=1 // pred_check_branch
      %1417 = sbr.rel (0) target = $region49
    $region48: #{deina_forward.1} parent=1 // pred_region
      %1418 = dma.done [#allocation3], 256
    $region49: #{deina_forward.1} parent=1 // pred_fallthru
      _
    // Predicated region
    $region50: #{deina_forward.1} parent=1 // pred_check
      _
    $region51: #{deina_forward.1} parent=1 // pred_check_branch
      %1420 = sbr.rel (0) target = $region53
    $region52: #{deina_forward.1} parent=1 // pred_region
      _
    $region53: #{deina_forward.1} parent=1 // pred_fallthru
      _
    %1421 = vsyncpa [#allocation3], 1

</llo_original>
